<compile_context>
chip_gen: v7x
topology: tpu7x:2x2x1
jax: 0.10.0
libtpu: 0.0.40
codegen_flags: <defaults>
</compile_context>

<pallas_src>
import functools

import numpy as np

import jax
import jax.numpy as jnp
from jax.experimental import pallas as pl
from jax.experimental.pallas import tpu as pltpu


def _dconv_shuffle_bn_relu_kernel(x_ref, p_ref, wm_ref, g_ref, b_ref, o_ref,
                                  *, W, eps):
    # x_ref:  (N, Cin, HW)        unshuffled input, flat spatial on lanes (f32)
    # p_ref:  (Cin, HW, HW)       one-hot permutation matrices (bf16, exact 0/1)
    # wm_ref: (9, Cin, Cout, HW)  conv weight * pad-mask table (f32)
    # g_ref:  (Cout, 1)           BN gamma
    # b_ref:  (Cout, 1)           BN beta
    # o_ref:  (N, Cout, HW)       lane-dense output
    N, Cin, HW = x_ref.shape
    Cout = wm_ref.shape[2]

    # ---- 1) Dconv_shuffle fused in-kernel: gather == one-hot matmul (MXU). --
    # Split x into bf16 hi/lo so both MXU operands are bf16 (single pass) while
    # keeping the gathered activations accurate to ~2^-17 relative (the review
    # warned against down-casting the activations outright).
    x = x_ref[...]                                          # (N, Cin, HW) f32
    hi = x.astype(jnp.bfloat16)
    lo = (x - hi.astype(jnp.float32)).astype(jnp.bfloat16)
    xsplit = jnp.concatenate([hi, lo], axis=0)              # (2N, Cin, HW) bf16

    rows = []
    for ci in range(Cin):
        # (2N, HW) @ (HW, HW) one-hot -> exact per-row gather, f32 accumulate.
        res = jnp.dot(xsplit[:, ci, :], p_ref[ci],
                      preferred_element_type=jnp.float32)   # (2N, HW)
        rows.append(res[0:N, :] + res[N:2 * N, :])          # hi + lo  ~= x
    shuf = jnp.concatenate(rows, axis=0)                    # (Cin*N, HW), row = ci*N + n

    # ---- 2) 3x3 conv, stride 1, pad 1: per-tap lane roll (XLU) + VPU FMAs ---
    # against the pre-folded weight*mask table.  Wrap-around positions from the
    # roll only hit lanes where wm is exactly zero (implicit pad=1).
    accs = [jnp.zeros((Cout, HW), jnp.float32) for _ in range(N)]
    t = 0
    for dy in (-1, 0, 1):
        for dx in (-1, 0, 1):
            d = dy * W + dx
            if d == 0:
                plane = shuf
            else:
                plane = pltpu.roll(shuf, shift=(-d) % HW, axis=1)
            for ci in range(Cin):
                wv = wm_ref[t, ci]                          # (Cout, HW), loaded once, shared by all n
                for n in range(N):
                    r = ci * N + n
                    accs[n] = accs[n] + wv * plane[r:r + 1, :]
            t += 1

    # ---- 3) BatchNorm2d, training mode (batch statistics over N,H,W) + ReLU -
    inv_cnt = 1.0 / float(N * HW)
    s1 = accs[0].sum(axis=1, keepdims=True)
    for n in range(1, N):
        s1 = s1 + accs[n].sum(axis=1, keepdims=True)
    mean = s1 * inv_cnt                                     # (Cout, 1)

    s2 = None
    for n in range(N):
        dlt = accs[n] - mean
        sq = (dlt * dlt).sum(axis=1, keepdims=True)
        s2 = sq if s2 is None else s2 + sq
    var = s2 * inv_cnt                                      # biased var (PyTorch train-mode normalization)

    scale = g_ref[...] * jax.lax.rsqrt(var + eps)           # (Cout, 1)
    shift = b_ref[...] - mean * scale
    for n in range(N):
        y = accs[n] * scale + shift
        o_ref[n] = jnp.maximum(y, 0.0).astype(o_ref.dtype)


def prepare_dconv_params(w_oihw, gamma, beta, perm, H, W):
    """One-time setup: one-hot shuffle matrices + weight*pad-mask table.

    Keeping this out of the jitted forward leaves the per-call path as a single
    pallas_call (no extra XLA dispatches / HBM round trips).
    """
    Cout, Cin, _, _ = w_oihw.shape
    HW = H * W

    # One-hot permutation matrices: P[ci, src, dst] = 1 iff perm[ci, dst] == src
    # (so  x[ci] @ P[ci]  ==  x[ci, perm[ci, :]]).  bf16 holds 0/1 exactly.
    src = jnp.arange(HW, dtype=jnp.int32)
    p_onehot = (perm[:, None, :] == src[None, :, None]).astype(jnp.bfloat16)

    # Per-tap validity masks over the flat spatial index (implicit pad=1),
    # folded directly into the conv weights: wm[t, ci, co, p] = w[co,ci,dy,dx]*valid_t[p]
    yy, xx = np.divmod(np.arange(HW), W)
    masks = []
    for dy in (-1, 0, 1):
        for dx in (-1, 0, 1):
            masks.append((yy + dy >= 0) & (yy + dy < H)
                         & (xx + dx >= 0) & (xx + dx < W))
    masks = jnp.asarray(np.stack(masks).astype(np.float32))          # (9, HW)

    w_taps = jnp.transpose(w_oihw, (2, 3, 1, 0)).reshape(9, Cin, Cout)
    wm = (w_taps[:, :, :, None].astype(jnp.float32)
          * masks[:, None, None, :])                                 # (9, Cin, Cout, HW)

    gamma2 = gamma.reshape(Cout, 1).astype(jnp.float32)
    beta2 = beta.reshape(Cout, 1).astype(jnp.float32)
    return p_onehot, wm, gamma2, beta2


@jax.jit
def dconv_3x3(x_nchw, p_onehot, wm, gamma2, beta2):
    """Forward of DCONV_3x3 (shuffle -> conv3x3 -> BN(train) -> ReLU), NCHW."""
    N, Cin, H, W = x_nchw.shape
    HW = H * W
    Cout = wm.shape[2]

    x_flat = x_nchw.reshape(N, Cin, HW)                  # free reshape
    kernel = functools.partial(_dconv_shuffle_bn_relu_kernel, W=W, eps=1e-5)

    out = pl.pallas_call(
        kernel,
        out_shape=jax.ShapeDtypeStruct((N, Cout, HW), jnp.float32),
        grid=(1,),                                        # single step: whole batch in one body
        in_specs=[
            pl.BlockSpec((N, Cin, HW), lambda i: (0, 0, 0)),
            pl.BlockSpec((Cin, HW, HW), lambda i: (0, 0, 0)),
            pl.BlockSpec((9, Cin, Cout, HW), lambda i: (0, 0, 0, 0)),
            pl.BlockSpec((Cout, 1), lambda i: (0, 0)),
            pl.BlockSpec((Cout, 1), lambda i: (0, 0)),
        ],
        out_specs=pl.BlockSpec((N, Cout, HW), lambda i: (0, 0, 0)),
        compiler_params=pltpu.CompilerParams(
            dimension_semantics=("arbitrary",)),
    )(x_flat, p_onehot, wm, gamma2, beta2)

    # (N, Cout, HW) -> (N, Cout, H, W) is a free reshape.
    return out.reshape(N, Cout, H, W)


def _reference(x, w, gamma, beta, perm):
    """Pure-JAX reference: shuffle -> conv3x3(pad=1) -> BN(train mode) -> ReLU."""
    N, Cin, H, W = x.shape
    flat = x.reshape(N, Cin, H * W)
    shuf = jnp.take_along_axis(flat, perm[None, :, :], axis=2)
    shuf = shuf.reshape(N, Cin, H, W)
    y = jax.lax.conv_general_dilated(
        shuf, w, window_strides=(1, 1), padding=((1, 1), (1, 1)),
        dimension_numbers=("NCHW", "OIHW", "NCHW"),
        precision=jax.lax.Precision.HIGHEST)
    mean = y.mean(axis=(0, 2, 3))
    var = y.var(axis=(0, 2, 3))           # biased, as PyTorch train-mode BN
    inv = jax.lax.rsqrt(var + 1e-5)
    y = ((y - mean[None, :, None, None]) * (gamma * inv)[None, :, None, None]
         + beta[None, :, None, None])
    return jnp.maximum(y, 0.0)


def make_params(key, inplanes, outplanes, H, W):
    k_w, k_g, k_b, k_p = jax.random.split(key, 4)
    # conv weight (Cout, Cin, 3, 3), no bias
    w = 0.1 * jax.random.normal(k_w, (outplanes, inplanes, 3, 3), jnp.float32)
    # BatchNorm2d affine params (running stats are not used in train-mode fwd)
    gamma = 1.0 + 0.1 * jax.random.normal(k_g, (outplanes,), jnp.float32)
    beta = 0.1 * jax.random.normal(k_b, (outplanes,), jnp.float32)
    # Dconv_shuffle: one spatial permutation per input channel, fixed at setup
    perm_keys = jax.random.split(k_p, inplanes)
    perm = jnp.stack(
        [jax.random.permutation(pk, H * W) for pk in perm_keys]).astype(jnp.int32)
    return w, gamma, beta, perm


if __name__ == "__main__":
    key = jax.random.PRNGKey(0)
    k_x, k_p = jax.random.split(key)

    N, Cin, H, W = 2, 4, 16, 16
    Cout = 8

    x = jax.random.normal(k_x, (N, Cin, H, W), jnp.float32)
    w, gamma, beta, perm = make_params(k_p, Cin, Cout, H, W)

    # one-time parameter preparation (one-hot shuffle matrices, wm table)
    p_onehot, wm, gamma2, beta2 = prepare_dconv_params(w, gamma, beta, perm, H, W)

    out = dconv_3x3(x, p_onehot, wm, gamma2, beta2)
    out = jax.block_until_ready(out)

    assert out.shape == (N, Cout, H, W)
    assert bool(jnp.all(out >= 0.0))      # ReLU epilogue

    ref = _reference(x, w, gamma, beta, perm)
    max_err = float(jnp.max(jnp.abs(out - ref)))
    assert max_err < 1e-3, f"max abs err vs reference: {max_err}"

    print("KERNEL_OK")
</pallas_src>

<mosaic_0001>
module attributes {stable_mosaic.version = 11 : i64} {
  func.func @_dconv_shuffle_bn_relu_kernel(%arg0: i32, %arg1: memref<2x4x256xf32, #tpu.memory_space<vmem>>, %arg2: memref<4x256x256xbf16, #tpu.memory_space<vmem>>, %arg3: memref<9x4x8x256xf32, #tpu.memory_space<vmem>>, %arg4: memref<8x1xf32, #tpu.memory_space<vmem>>, %arg5: memref<8x1xf32, #tpu.memory_space<vmem>>, %arg6: memref<2x8x256xf32, #tpu.memory_space<vmem>>) attributes {dimension_semantics = [#tpu.dimension_semantics<arbitrary>], iteration_bounds = array<i64: 1>, scalar_prefetch = 0 : i64, scratch_operands = 0 : i64, tpu.core_type = #tpu.core_type<tc>, window_params = [{pipeline_mode = #tpu.pipeline_mode<synchronous>, transform_indices = @transform_0, window_bounds = array<i64: 2, 4, 256>}, {pipeline_mode = #tpu.pipeline_mode<synchronous>, transform_indices = @transform_1, window_bounds = array<i64: 4, 256, 256>}, {pipeline_mode = #tpu.pipeline_mode<synchronous>, transform_indices = @transform_2, window_bounds = array<i64: 9, 4, 8, 256>}, {pipeline_mode = #tpu.pipeline_mode<synchronous>, transform_indices = @transform_3, window_bounds = array<i64: 8, 1>}, {pipeline_mode = #tpu.pipeline_mode<synchronous>, transform_indices = @transform_4, window_bounds = array<i64: 8, 1>}, {pipeline_mode = #tpu.pipeline_mode<synchronous>, transform_indices = @transform_5, window_bounds = array<i64: 2, 8, 256>}]} {
    %c0 = arith.constant 0 : index
    %c0_0 = arith.constant 0 : index
    %c0_1 = arith.constant 0 : index
    %0 = vector.load %arg1[%c0, %c0_0, %c0_1] : memref<2x4x256xf32, #tpu.memory_space<vmem>>, vector<2x4x256xf32>
    %1 = arith.truncf %0 : vector<2x4x256xf32> to vector<2x4x256xbf16>
    %2 = arith.extf %1 : vector<2x4x256xbf16> to vector<2x4x256xf32>
    %3 = arith.subf %0, %2 : vector<2x4x256xf32>
    %4 = arith.truncf %3 : vector<2x4x256xf32> to vector<2x4x256xbf16>
    %5 = tpu.concatenate %1, %4 in 0 : vector<2x4x256xbf16>, vector<2x4x256xbf16> -> vector<4x4x256xbf16>
    %6 = vector.extract_strided_slice %5 {offsets = [0, 0, 0], sizes = [4, 1, 256], strides = [1, 1, 1]} : vector<4x4x256xbf16> to vector<4x1x256xbf16>
    %7 = vector.shape_cast %6 : vector<4x1x256xbf16> to vector<4x256xbf16>
    %c0_2 = arith.constant 0 : index
    %c0_3 = arith.constant 0 : index
    %c0_4 = arith.constant 0 : index
    %8 = vector.load %arg2[%c0_2, %c0_3, %c0_4] : memref<4x256x256xbf16, #tpu.memory_space<vmem>>, vector<1x256x256xbf16>
    %9 = vector.shape_cast %8 : vector<1x256x256xbf16> to vector<256x256xbf16>
    %cst = arith.constant dense<0.000000e+00> : vector<4x256xf32>
    %10 = tpu.matmul %7, %9, %cst {dimension_numbers = #tpu.dot_dimension_numbers<[1], [0], [0], [1], [0, 0, 1, 1], [], []>} : vector<4x256xbf16>, vector<256x256xbf16>, vector<4x256xf32> -> vector<4x256xf32>
    %11 = vector.extract_strided_slice %10 {offsets = [0, 0], sizes = [2, 256], strides = [1, 1]} : vector<4x256xf32> to vector<2x256xf32>
    %12 = vector.extract_strided_slice %10 {offsets = [2, 0], sizes = [2, 256], strides = [1, 1]} : vector<4x256xf32> to vector<2x256xf32>
    %13 = arith.addf %11, %12 : vector<2x256xf32>
    %14 = vector.extract_strided_slice %5 {offsets = [0, 1, 0], sizes = [4, 1, 256], strides = [1, 1, 1]} : vector<4x4x256xbf16> to vector<4x1x256xbf16>
    %15 = vector.shape_cast %14 : vector<4x1x256xbf16> to vector<4x256xbf16>
    %c1 = arith.constant 1 : index
    %c0_5 = arith.constant 0 : index
    %c0_6 = arith.constant 0 : index
    %16 = vector.load %arg2[%c1, %c0_5, %c0_6] : memref<4x256x256xbf16, #tpu.memory_space<vmem>>, vector<1x256x256xbf16>
    %17 = vector.shape_cast %16 : vector<1x256x256xbf16> to vector<256x256xbf16>
    %cst_7 = arith.constant dense<0.000000e+00> : vector<4x256xf32>
    %18 = tpu.matmul %15, %17, %cst_7 {dimension_numbers = #tpu.dot_dimension_numbers<[1], [0], [0], [1], [0, 0, 1, 1], [], []>} : vector<4x256xbf16>, vector<256x256xbf16>, vector<4x256xf32> -> vector<4x256xf32>
    %19 = vector.extract_strided_slice %18 {offsets = [0, 0], sizes = [2, 256], strides = [1, 1]} : vector<4x256xf32> to vector<2x256xf32>
    %20 = vector.extract_strided_slice %18 {offsets = [2, 0], sizes = [2, 256], strides = [1, 1]} : vector<4x256xf32> to vector<2x256xf32>
    %21 = arith.addf %19, %20 : vector<2x256xf32>
    %22 = vector.extract_strided_slice %5 {offsets = [0, 2, 0], sizes = [4, 1, 256], strides = [1, 1, 1]} : vector<4x4x256xbf16> to vector<4x1x256xbf16>
    %23 = vector.shape_cast %22 : vector<4x1x256xbf16> to vector<4x256xbf16>
    %c2 = arith.constant 2 : index
    %c0_8 = arith.constant 0 : index
    %c0_9 = arith.constant 0 : index
    %24 = vector.load %arg2[%c2, %c0_8, %c0_9] : memref<4x256x256xbf16, #tpu.memory_space<vmem>>, vector<1x256x256xbf16>
    %25 = vector.shape_cast %24 : vector<1x256x256xbf16> to vector<256x256xbf16>
    %cst_10 = arith.constant dense<0.000000e+00> : vector<4x256xf32>
    %26 = tpu.matmul %23, %25, %cst_10 {dimension_numbers = #tpu.dot_dimension_numbers<[1], [0], [0], [1], [0, 0, 1, 1], [], []>} : vector<4x256xbf16>, vector<256x256xbf16>, vector<4x256xf32> -> vector<4x256xf32>
    %27 = vector.extract_strided_slice %26 {offsets = [0, 0], sizes = [2, 256], strides = [1, 1]} : vector<4x256xf32> to vector<2x256xf32>
    %28 = vector.extract_strided_slice %26 {offsets = [2, 0], sizes = [2, 256], strides = [1, 1]} : vector<4x256xf32> to vector<2x256xf32>
    %29 = arith.addf %27, %28 : vector<2x256xf32>
    %30 = vector.extract_strided_slice %5 {offsets = [0, 3, 0], sizes = [4, 1, 256], strides = [1, 1, 1]} : vector<4x4x256xbf16> to vector<4x1x256xbf16>
    %31 = vector.shape_cast %30 : vector<4x1x256xbf16> to vector<4x256xbf16>
    %c3 = arith.constant 3 : index
    %c0_11 = arith.constant 0 : index
    %c0_12 = arith.constant 0 : index
    %32 = vector.load %arg2[%c3, %c0_11, %c0_12] : memref<4x256x256xbf16, #tpu.memory_space<vmem>>, vector<1x256x256xbf16>
    %33 = vector.shape_cast %32 : vector<1x256x256xbf16> to vector<256x256xbf16>
    %cst_13 = arith.constant dense<0.000000e+00> : vector<4x256xf32>
    %34 = tpu.matmul %31, %33, %cst_13 {dimension_numbers = #tpu.dot_dimension_numbers<[1], [0], [0], [1], [0, 0, 1, 1], [], []>} : vector<4x256xbf16>, vector<256x256xbf16>, vector<4x256xf32> -> vector<4x256xf32>
    %35 = vector.extract_strided_slice %34 {offsets = [0, 0], sizes = [2, 256], strides = [1, 1]} : vector<4x256xf32> to vector<2x256xf32>
    %36 = vector.extract_strided_slice %34 {offsets = [2, 0], sizes = [2, 256], strides = [1, 1]} : vector<4x256xf32> to vector<2x256xf32>
    %37 = arith.addf %35, %36 : vector<2x256xf32>
    %38 = tpu.concatenate %13, %21, %29, %37 in 0 : vector<2x256xf32>, vector<2x256xf32>, vector<2x256xf32>, vector<2x256xf32> -> vector<8x256xf32>
    %cst_14 = arith.constant 0.000000e+00 : f32
    %39 = vector.broadcast %cst_14 : f32 to vector<8x256xf32>
    %cst_15 = arith.constant 0.000000e+00 : f32
    %40 = vector.broadcast %cst_15 : f32 to vector<8x256xf32>
    %c17_i32 = arith.constant 17 : i32
    %41 = tpu.dynamic_rotate %38 by %c17_i32 dim 1 : vector<8x256xf32>, i32 -> vector<8x256xf32>
    %c0_16 = arith.constant 0 : index
    %c0_17 = arith.constant 0 : index
    %c0_18 = arith.constant 0 : index
    %c0_19 = arith.constant 0 : index
    %42 = vector.load %arg3[%c0_16, %c0_17, %c0_18, %c0_19] : memref<9x4x8x256xf32, #tpu.memory_space<vmem>>, vector<1x1x8x256xf32>
    %43 = vector.shape_cast %42 : vector<1x1x8x256xf32> to vector<8x256xf32>
    %44 = vector.extract_strided_slice %41 {offsets = [0, 0], sizes = [1, 256], strides = [1, 1]} : vector<8x256xf32> to vector<1x256xf32>
    %45 = vector.broadcast %44 : vector<1x256xf32> to vector<8x256xf32>
    %46 = arith.mulf %43, %45 : vector<8x256xf32>
    %47 = arith.addf %39, %46 : vector<8x256xf32>
    %48 = vector.extract_strided_slice %41 {offsets = [1, 0], sizes = [1, 256], strides = [1, 1]} : vector<8x256xf32> to vector<1x256xf32>
    %49 = vector.broadcast %48 : vector<1x256xf32> to vector<8x256xf32>
    %50 = arith.mulf %43, %49 : vector<8x256xf32>
    %51 = arith.addf %40, %50 : vector<8x256xf32>
    %c0_20 = arith.constant 0 : index
    %c1_21 = arith.constant 1 : index
    %c0_22 = arith.constant 0 : index
    %c0_23 = arith.constant 0 : index
    %52 = vector.load %arg3[%c0_20, %c1_21, %c0_22, %c0_23] : memref<9x4x8x256xf32, #tpu.memory_space<vmem>>, vector<1x1x8x256xf32>
    %53 = vector.shape_cast %52 : vector<1x1x8x256xf32> to vector<8x256xf32>
    %54 = vector.extract_strided_slice %41 {offsets = [2, 0], sizes = [1, 256], strides = [1, 1]} : vector<8x256xf32> to vector<1x256xf32>
    %55 = vector.broadcast %54 : vector<1x256xf32> to vector<8x256xf32>
    %56 = arith.mulf %53, %55 : vector<8x256xf32>
    %57 = arith.addf %47, %56 : vector<8x256xf32>
    %58 = vector.extract_strided_slice %41 {offsets = [3, 0], sizes = [1, 256], strides = [1, 1]} : vector<8x256xf32> to vector<1x256xf32>
    %59 = vector.broadcast %58 : vector<1x256xf32> to vector<8x256xf32>
    %60 = arith.mulf %53, %59 : vector<8x256xf32>
    %61 = arith.addf %51, %60 : vector<8x256xf32>
    %c0_24 = arith.constant 0 : index
    %c2_25 = arith.constant 2 : index
    %c0_26 = arith.constant 0 : index
    %c0_27 = arith.constant 0 : index
    %62 = vector.load %arg3[%c0_24, %c2_25, %c0_26, %c0_27] : memref<9x4x8x256xf32, #tpu.memory_space<vmem>>, vector<1x1x8x256xf32>
    %63 = vector.shape_cast %62 : vector<1x1x8x256xf32> to vector<8x256xf32>
    %64 = vector.extract_strided_slice %41 {offsets = [4, 0], sizes = [1, 256], strides = [1, 1]} : vector<8x256xf32> to vector<1x256xf32>
    %65 = vector.broadcast %64 : vector<1x256xf32> to vector<8x256xf32>
    %66 = arith.mulf %63, %65 : vector<8x256xf32>
    %67 = arith.addf %57, %66 : vector<8x256xf32>
    %68 = vector.extract_strided_slice %41 {offsets = [5, 0], sizes = [1, 256], strides = [1, 1]} : vector<8x256xf32> to vector<1x256xf32>
    %69 = vector.broadcast %68 : vector<1x256xf32> to vector<8x256xf32>
    %70 = arith.mulf %63, %69 : vector<8x256xf32>
    %71 = arith.addf %61, %70 : vector<8x256xf32>
    %c0_28 = arith.constant 0 : index
    %c3_29 = arith.constant 3 : index
    %c0_30 = arith.constant 0 : index
    %c0_31 = arith.constant 0 : index
    %72 = vector.load %arg3[%c0_28, %c3_29, %c0_30, %c0_31] : memref<9x4x8x256xf32, #tpu.memory_space<vmem>>, vector<1x1x8x256xf32>
    %73 = vector.shape_cast %72 : vector<1x1x8x256xf32> to vector<8x256xf32>
    %74 = vector.extract_strided_slice %41 {offsets = [6, 0], sizes = [1, 256], strides = [1, 1]} : vector<8x256xf32> to vector<1x256xf32>
    %75 = vector.broadcast %74 : vector<1x256xf32> to vector<8x256xf32>
    %76 = arith.mulf %73, %75 : vector<8x256xf32>
    %77 = arith.addf %67, %76 : vector<8x256xf32>
    %78 = vector.extract_strided_slice %41 {offsets = [7, 0], sizes = [1, 256], strides = [1, 1]} : vector<8x256xf32> to vector<1x256xf32>
    %79 = vector.broadcast %78 : vector<1x256xf32> to vector<8x256xf32>
    %80 = arith.mulf %73, %79 : vector<8x256xf32>
    %81 = arith.addf %71, %80 : vector<8x256xf32>
    %c16_i32 = arith.constant 16 : i32
    %82 = tpu.dynamic_rotate %38 by %c16_i32 dim 1 : vector<8x256xf32>, i32 -> vector<8x256xf32>
    %c1_32 = arith.constant 1 : index
    %c0_33 = arith.constant 0 : index
    %c0_34 = arith.constant 0 : index
    %c0_35 = arith.constant 0 : index
    %83 = vector.load %arg3[%c1_32, %c0_33, %c0_34, %c0_35] : memref<9x4x8x256xf32, #tpu.memory_space<vmem>>, vector<1x1x8x256xf32>
    %84 = vector.shape_cast %83 : vector<1x1x8x256xf32> to vector<8x256xf32>
    %85 = vector.extract_strided_slice %82 {offsets = [0, 0], sizes = [1, 256], strides = [1, 1]} : vector<8x256xf32> to vector<1x256xf32>
    %86 = vector.broadcast %85 : vector<1x256xf32> to vector<8x256xf32>
    %87 = arith.mulf %84, %86 : vector<8x256xf32>
    %88 = arith.addf %77, %87 : vector<8x256xf32>
    %89 = vector.extract_strided_slice %82 {offsets = [1, 0], sizes = [1, 256], strides = [1, 1]} : vector<8x256xf32> to vector<1x256xf32>
    %90 = vector.broadcast %89 : vector<1x256xf32> to vector<8x256xf32>
    %91 = arith.mulf %84, %90 : vector<8x256xf32>
    %92 = arith.addf %81, %91 : vector<8x256xf32>
    %c1_36 = arith.constant 1 : index
    %c1_37 = arith.constant 1 : index
    %c0_38 = arith.constant 0 : index
    %c0_39 = arith.constant 0 : index
    %93 = vector.load %arg3[%c1_36, %c1_37, %c0_38, %c0_39] : memref<9x4x8x256xf32, #tpu.memory_space<vmem>>, vector<1x1x8x256xf32>
    %94 = vector.shape_cast %93 : vector<1x1x8x256xf32> to vector<8x256xf32>
    %95 = vector.extract_strided_slice %82 {offsets = [2, 0], sizes = [1, 256], strides = [1, 1]} : vector<8x256xf32> to vector<1x256xf32>
    %96 = vector.broadcast %95 : vector<1x256xf32> to vector<8x256xf32>
    %97 = arith.mulf %94, %96 : vector<8x256xf32>
    %98 = arith.addf %88, %97 : vector<8x256xf32>
    %99 = vector.extract_strided_slice %82 {offsets = [3, 0], sizes = [1, 256], strides = [1, 1]} : vector<8x256xf32> to vector<1x256xf32>
    %100 = vector.broadcast %99 : vector<1x256xf32> to vector<8x256xf32>
    %101 = arith.mulf %94, %100 : vector<8x256xf32>
    %102 = arith.addf %92, %101 : vector<8x256xf32>
    %c1_40 = arith.constant 1 : index
    %c2_41 = arith.constant 2 : index
    %c0_42 = arith.constant 0 : index
    %c0_43 = arith.constant 0 : index
    %103 = vector.load %arg3[%c1_40, %c2_41, %c0_42, %c0_43] : memref<9x4x8x256xf32, #tpu.memory_space<vmem>>, vector<1x1x8x256xf32>
    %104 = vector.shape_cast %103 : vector<1x1x8x256xf32> to vector<8x256xf32>
    %105 = vector.extract_strided_slice %82 {offsets = [4, 0], sizes = [1, 256], strides = [1, 1]} : vector<8x256xf32> to vector<1x256xf32>
    %106 = vector.broadcast %105 : vector<1x256xf32> to vector<8x256xf32>
    %107 = arith.mulf %104, %106 : vector<8x256xf32>
    %108 = arith.addf %98, %107 : vector<8x256xf32>
    %109 = vector.extract_strided_slice %82 {offsets = [5, 0], sizes = [1, 256], strides = [1, 1]} : vector<8x256xf32> to vector<1x256xf32>
    %110 = vector.broadcast %109 : vector<1x256xf32> to vector<8x256xf32>
    %111 = arith.mulf %104, %110 : vector<8x256xf32>
    %112 = arith.addf %102, %111 : vector<8x256xf32>
    %c1_44 = arith.constant 1 : index
    %c3_45 = arith.constant 3 : index
    %c0_46 = arith.constant 0 : index
    %c0_47 = arith.constant 0 : index
    %113 = vector.load %arg3[%c1_44, %c3_45, %c0_46, %c0_47] : memref<9x4x8x256xf32, #tpu.memory_space<vmem>>, vector<1x1x8x256xf32>
    %114 = vector.shape_cast %113 : vector<1x1x8x256xf32> to vector<8x256xf32>
    %115 = vector.extract_strided_slice %82 {offsets = [6, 0], sizes = [1, 256], strides = [1, 1]} : vector<8x256xf32> to vector<1x256xf32>
    %116 = vector.broadcast %115 : vector<1x256xf32> to vector<8x256xf32>
    %117 = arith.mulf %114, %116 : vector<8x256xf32>
    %118 = arith.addf %108, %117 : vector<8x256xf32>
    %119 = vector.extract_strided_slice %82 {offsets = [7, 0], sizes = [1, 256], strides = [1, 1]} : vector<8x256xf32> to vector<1x256xf32>
    %120 = vector.broadcast %119 : vector<1x256xf32> to vector<8x256xf32>
    %121 = arith.mulf %114, %120 : vector<8x256xf32>
    %122 = arith.addf %112, %121 : vector<8x256xf32>
    %c15_i32 = arith.constant 15 : i32
    %123 = tpu.dynamic_rotate %38 by %c15_i32 dim 1 : vector<8x256xf32>, i32 -> vector<8x256xf32>
    %c2_48 = arith.constant 2 : index
    %c0_49 = arith.constant 0 : index
    %c0_50 = arith.constant 0 : index
    %c0_51 = arith.constant 0 : index
    %124 = vector.load %arg3[%c2_48, %c0_49, %c0_50, %c0_51] : memref<9x4x8x256xf32, #tpu.memory_space<vmem>>, vector<1x1x8x256xf32>
    %125 = vector.shape_cast %124 : vector<1x1x8x256xf32> to vector<8x256xf32>
    %126 = vector.extract_strided_slice %123 {offsets = [0, 0], sizes = [1, 256], strides = [1, 1]} : vector<8x256xf32> to vector<1x256xf32>
    %127 = vector.broadcast %126 : vector<1x256xf32> to vector<8x256xf32>
    %128 = arith.mulf %125, %127 : vector<8x256xf32>
    %129 = arith.addf %118, %128 : vector<8x256xf32>
    %130 = vector.extract_strided_slice %123 {offsets = [1, 0], sizes = [1, 256], strides = [1, 1]} : vector<8x256xf32> to vector<1x256xf32>
    %131 = vector.broadcast %130 : vector<1x256xf32> to vector<8x256xf32>
    %132 = arith.mulf %125, %131 : vector<8x256xf32>
    %133 = arith.addf %122, %132 : vector<8x256xf32>
    %c2_52 = arith.constant 2 : index
    %c1_53 = arith.constant 1 : index
    %c0_54 = arith.constant 0 : index
    %c0_55 = arith.constant 0 : index
    %134 = vector.load %arg3[%c2_52, %c1_53, %c0_54, %c0_55] : memref<9x4x8x256xf32, #tpu.memory_space<vmem>>, vector<1x1x8x256xf32>
    %135 = vector.shape_cast %134 : vector<1x1x8x256xf32> to vector<8x256xf32>
    %136 = vector.extract_strided_slice %123 {offsets = [2, 0], sizes = [1, 256], strides = [1, 1]} : vector<8x256xf32> to vector<1x256xf32>
    %137 = vector.broadcast %136 : vector<1x256xf32> to vector<8x256xf32>
    %138 = arith.mulf %135, %137 : vector<8x256xf32>
    %139 = arith.addf %129, %138 : vector<8x256xf32>
    %140 = vector.extract_strided_slice %123 {offsets = [3, 0], sizes = [1, 256], strides = [1, 1]} : vector<8x256xf32> to vector<1x256xf32>
    %141 = vector.broadcast %140 : vector<1x256xf32> to vector<8x256xf32>
    %142 = arith.mulf %135, %141 : vector<8x256xf32>
    %143 = arith.addf %133, %142 : vector<8x256xf32>
    %c2_56 = arith.constant 2 : index
    %c2_57 = arith.constant 2 : index
    %c0_58 = arith.constant 0 : index
    %c0_59 = arith.constant 0 : index
    %144 = vector.load %arg3[%c2_56, %c2_57, %c0_58, %c0_59] : memref<9x4x8x256xf32, #tpu.memory_space<vmem>>, vector<1x1x8x256xf32>
    %145 = vector.shape_cast %144 : vector<1x1x8x256xf32> to vector<8x256xf32>
    %146 = vector.extract_strided_slice %123 {offsets = [4, 0], sizes = [1, 256], strides = [1, 1]} : vector<8x256xf32> to vector<1x256xf32>
    %147 = vector.broadcast %146 : vector<1x256xf32> to vector<8x256xf32>
    %148 = arith.mulf %145, %147 : vector<8x256xf32>
    %149 = arith.addf %139, %148 : vector<8x256xf32>
    %150 = vector.extract_strided_slice %123 {offsets = [5, 0], sizes = [1, 256], strides = [1, 1]} : vector<8x256xf32> to vector<1x256xf32>
    %151 = vector.broadcast %150 : vector<1x256xf32> to vector<8x256xf32>
    %152 = arith.mulf %145, %151 : vector<8x256xf32>
    %153 = arith.addf %143, %152 : vector<8x256xf32>
    %c2_60 = arith.constant 2 : index
    %c3_61 = arith.constant 3 : index
    %c0_62 = arith.constant 0 : index
    %c0_63 = arith.constant 0 : index
    %154 = vector.load %arg3[%c2_60, %c3_61, %c0_62, %c0_63] : memref<9x4x8x256xf32, #tpu.memory_space<vmem>>, vector<1x1x8x256xf32>
    %155 = vector.shape_cast %154 : vector<1x1x8x256xf32> to vector<8x256xf32>
    %156 = vector.extract_strided_slice %123 {offsets = [6, 0], sizes = [1, 256], strides = [1, 1]} : vector<8x256xf32> to vector<1x256xf32>
    %157 = vector.broadcast %156 : vector<1x256xf32> to vector<8x256xf32>
    %158 = arith.mulf %155, %157 : vector<8x256xf32>
    %159 = arith.addf %149, %158 : vector<8x256xf32>
    %160 = vector.extract_strided_slice %123 {offsets = [7, 0], sizes = [1, 256], strides = [1, 1]} : vector<8x256xf32> to vector<1x256xf32>
    %161 = vector.broadcast %160 : vector<1x256xf32> to vector<8x256xf32>
    %162 = arith.mulf %155, %161 : vector<8x256xf32>
    %163 = arith.addf %153, %162 : vector<8x256xf32>
    %c1_i32 = arith.constant 1 : i32
    %164 = tpu.dynamic_rotate %38 by %c1_i32 dim 1 : vector<8x256xf32>, i32 -> vector<8x256xf32>
    %c3_64 = arith.constant 3 : index
    %c0_65 = arith.constant 0 : index
    %c0_66 = arith.constant 0 : index
    %c0_67 = arith.constant 0 : index
    %165 = vector.load %arg3[%c3_64, %c0_65, %c0_66, %c0_67] : memref<9x4x8x256xf32, #tpu.memory_space<vmem>>, vector<1x1x8x256xf32>
    %166 = vector.shape_cast %165 : vector<1x1x8x256xf32> to vector<8x256xf32>
    %167 = vector.extract_strided_slice %164 {offsets = [0, 0], sizes = [1, 256], strides = [1, 1]} : vector<8x256xf32> to vector<1x256xf32>
    %168 = vector.broadcast %167 : vector<1x256xf32> to vector<8x256xf32>
    %169 = arith.mulf %166, %168 : vector<8x256xf32>
    %170 = arith.addf %159, %169 : vector<8x256xf32>
    %171 = vector.extract_strided_slice %164 {offsets = [1, 0], sizes = [1, 256], strides = [1, 1]} : vector<8x256xf32> to vector<1x256xf32>
    %172 = vector.broadcast %171 : vector<1x256xf32> to vector<8x256xf32>
    %173 = arith.mulf %166, %172 : vector<8x256xf32>
    %174 = arith.addf %163, %173 : vector<8x256xf32>
    %c3_68 = arith.constant 3 : index
    %c1_69 = arith.constant 1 : index
    %c0_70 = arith.constant 0 : index
    %c0_71 = arith.constant 0 : index
    %175 = vector.load %arg3[%c3_68, %c1_69, %c0_70, %c0_71] : memref<9x4x8x256xf32, #tpu.memory_space<vmem>>, vector<1x1x8x256xf32>
    %176 = vector.shape_cast %175 : vector<1x1x8x256xf32> to vector<8x256xf32>
    %177 = vector.extract_strided_slice %164 {offsets = [2, 0], sizes = [1, 256], strides = [1, 1]} : vector<8x256xf32> to vector<1x256xf32>
    %178 = vector.broadcast %177 : vector<1x256xf32> to vector<8x256xf32>
    %179 = arith.mulf %176, %178 : vector<8x256xf32>
    %180 = arith.addf %170, %179 : vector<8x256xf32>
    %181 = vector.extract_strided_slice %164 {offsets = [3, 0], sizes = [1, 256], strides = [1, 1]} : vector<8x256xf32> to vector<1x256xf32>
    %182 = vector.broadcast %181 : vector<1x256xf32> to vector<8x256xf32>
    %183 = arith.mulf %176, %182 : vector<8x256xf32>
    %184 = arith.addf %174, %183 : vector<8x256xf32>
    %c3_72 = arith.constant 3 : index
    %c2_73 = arith.constant 2 : index
    %c0_74 = arith.constant 0 : index
    %c0_75 = arith.constant 0 : index
    %185 = vector.load %arg3[%c3_72, %c2_73, %c0_74, %c0_75] : memref<9x4x8x256xf32, #tpu.memory_space<vmem>>, vector<1x1x8x256xf32>
    %186 = vector.shape_cast %185 : vector<1x1x8x256xf32> to vector<8x256xf32>
    %187 = vector.extract_strided_slice %164 {offsets = [4, 0], sizes = [1, 256], strides = [1, 1]} : vector<8x256xf32> to vector<1x256xf32>
    %188 = vector.broadcast %187 : vector<1x256xf32> to vector<8x256xf32>
    %189 = arith.mulf %186, %188 : vector<8x256xf32>
    %190 = arith.addf %180, %189 : vector<8x256xf32>
    %191 = vector.extract_strided_slice %164 {offsets = [5, 0], sizes = [1, 256], strides = [1, 1]} : vector<8x256xf32> to vector<1x256xf32>
    %192 = vector.broadcast %191 : vector<1x256xf32> to vector<8x256xf32>
    %193 = arith.mulf %186, %192 : vector<8x256xf32>
    %194 = arith.addf %184, %193 : vector<8x256xf32>
    %c3_76 = arith.constant 3 : index
    %c3_77 = arith.constant 3 : index
    %c0_78 = arith.constant 0 : index
    %c0_79 = arith.constant 0 : index
    %195 = vector.load %arg3[%c3_76, %c3_77, %c0_78, %c0_79] : memref<9x4x8x256xf32, #tpu.memory_space<vmem>>, vector<1x1x8x256xf32>
    %196 = vector.shape_cast %195 : vector<1x1x8x256xf32> to vector<8x256xf32>
    %197 = vector.extract_strided_slice %164 {offsets = [6, 0], sizes = [1, 256], strides = [1, 1]} : vector<8x256xf32> to vector<1x256xf32>
    %198 = vector.broadcast %197 : vector<1x256xf32> to vector<8x256xf32>
    %199 = arith.mulf %196, %198 : vector<8x256xf32>
    %200 = arith.addf %190, %199 : vector<8x256xf32>
    %201 = vector.extract_strided_slice %164 {offsets = [7, 0], sizes = [1, 256], strides = [1, 1]} : vector<8x256xf32> to vector<1x256xf32>
    %202 = vector.broadcast %201 : vector<1x256xf32> to vector<8x256xf32>
    %203 = arith.mulf %196, %202 : vector<8x256xf32>
    %204 = arith.addf %194, %203 : vector<8x256xf32>
    %c4 = arith.constant 4 : index
    %c0_80 = arith.constant 0 : index
    %c0_81 = arith.constant 0 : index
    %c0_82 = arith.constant 0 : index
    %205 = vector.load %arg3[%c4, %c0_80, %c0_81, %c0_82] : memref<9x4x8x256xf32, #tpu.memory_space<vmem>>, vector<1x1x8x256xf32>
    %206 = vector.shape_cast %205 : vector<1x1x8x256xf32> to vector<8x256xf32>
    %207 = vector.extract_strided_slice %38 {offsets = [0, 0], sizes = [1, 256], strides = [1, 1]} : vector<8x256xf32> to vector<1x256xf32>
    %208 = vector.broadcast %207 : vector<1x256xf32> to vector<8x256xf32>
    %209 = arith.mulf %206, %208 : vector<8x256xf32>
    %210 = arith.addf %200, %209 : vector<8x256xf32>
    %211 = vector.extract_strided_slice %38 {offsets = [1, 0], sizes = [1, 256], strides = [1, 1]} : vector<8x256xf32> to vector<1x256xf32>
    %212 = vector.broadcast %211 : vector<1x256xf32> to vector<8x256xf32>
    %213 = arith.mulf %206, %212 : vector<8x256xf32>
    %214 = arith.addf %204, %213 : vector<8x256xf32>
    %c4_83 = arith.constant 4 : index
    %c1_84 = arith.constant 1 : index
    %c0_85 = arith.constant 0 : index
    %c0_86 = arith.constant 0 : index
    %215 = vector.load %arg3[%c4_83, %c1_84, %c0_85, %c0_86] : memref<9x4x8x256xf32, #tpu.memory_space<vmem>>, vector<1x1x8x256xf32>
    %216 = vector.shape_cast %215 : vector<1x1x8x256xf32> to vector<8x256xf32>
    %217 = vector.extract_strided_slice %38 {offsets = [2, 0], sizes = [1, 256], strides = [1, 1]} : vector<8x256xf32> to vector<1x256xf32>
    %218 = vector.broadcast %217 : vector<1x256xf32> to vector<8x256xf32>
    %219 = arith.mulf %216, %218 : vector<8x256xf32>
    %220 = arith.addf %210, %219 : vector<8x256xf32>
    %221 = vector.extract_strided_slice %38 {offsets = [3, 0], sizes = [1, 256], strides = [1, 1]} : vector<8x256xf32> to vector<1x256xf32>
    %222 = vector.broadcast %221 : vector<1x256xf32> to vector<8x256xf32>
    %223 = arith.mulf %216, %222 : vector<8x256xf32>
    %224 = arith.addf %214, %223 : vector<8x256xf32>
    %c4_87 = arith.constant 4 : index
    %c2_88 = arith.constant 2 : index
    %c0_89 = arith.constant 0 : index
    %c0_90 = arith.constant 0 : index
    %225 = vector.load %arg3[%c4_87, %c2_88, %c0_89, %c0_90] : memref<9x4x8x256xf32, #tpu.memory_space<vmem>>, vector<1x1x8x256xf32>
    %226 = vector.shape_cast %225 : vector<1x1x8x256xf32> to vector<8x256xf32>
    %227 = vector.extract_strided_slice %38 {offsets = [4, 0], sizes = [1, 256], strides = [1, 1]} : vector<8x256xf32> to vector<1x256xf32>
    %228 = vector.broadcast %227 : vector<1x256xf32> to vector<8x256xf32>
    %229 = arith.mulf %226, %228 : vector<8x256xf32>
    %230 = arith.addf %220, %229 : vector<8x256xf32>
    %231 = vector.extract_strided_slice %38 {offsets = [5, 0], sizes = [1, 256], strides = [1, 1]} : vector<8x256xf32> to vector<1x256xf32>
    %232 = vector.broadcast %231 : vector<1x256xf32> to vector<8x256xf32>
    %233 = arith.mulf %226, %232 : vector<8x256xf32>
    %234 = arith.addf %224, %233 : vector<8x256xf32>
    %c4_91 = arith.constant 4 : index
    %c3_92 = arith.constant 3 : index
    %c0_93 = arith.constant 0 : index
    %c0_94 = arith.constant 0 : index
    %235 = vector.load %arg3[%c4_91, %c3_92, %c0_93, %c0_94] : memref<9x4x8x256xf32, #tpu.memory_space<vmem>>, vector<1x1x8x256xf32>
    %236 = vector.shape_cast %235 : vector<1x1x8x256xf32> to vector<8x256xf32>
    %237 = vector.extract_strided_slice %38 {offsets = [6, 0], sizes = [1, 256], strides = [1, 1]} : vector<8x256xf32> to vector<1x256xf32>
    %238 = vector.broadcast %237 : vector<1x256xf32> to vector<8x256xf32>
    %239 = arith.mulf %236, %238 : vector<8x256xf32>
    %240 = arith.addf %230, %239 : vector<8x256xf32>
    %241 = vector.extract_strided_slice %38 {offsets = [7, 0], sizes = [1, 256], strides = [1, 1]} : vector<8x256xf32> to vector<1x256xf32>
    %242 = vector.broadcast %241 : vector<1x256xf32> to vector<8x256xf32>
    %243 = arith.mulf %236, %242 : vector<8x256xf32>
    %244 = arith.addf %234, %243 : vector<8x256xf32>
    %c255_i32 = arith.constant 255 : i32
    %245 = tpu.dynamic_rotate %38 by %c255_i32 dim 1 : vector<8x256xf32>, i32 -> vector<8x256xf32>
    %c5 = arith.constant 5 : index
    %c0_95 = arith.constant 0 : index
    %c0_96 = arith.constant 0 : index
    %c0_97 = arith.constant 0 : index
    %246 = vector.load %arg3[%c5, %c0_95, %c0_96, %c0_97] : memref<9x4x8x256xf32, #tpu.memory_space<vmem>>, vector<1x1x8x256xf32>
    %247 = vector.shape_cast %246 : vector<1x1x8x256xf32> to vector<8x256xf32>
    %248 = vector.extract_strided_slice %245 {offsets = [0, 0], sizes = [1, 256], strides = [1, 1]} : vector<8x256xf32> to vector<1x256xf32>
    %249 = vector.broadcast %248 : vector<1x256xf32> to vector<8x256xf32>
    %250 = arith.mulf %247, %249 : vector<8x256xf32>
    %251 = arith.addf %240, %250 : vector<8x256xf32>
    %252 = vector.extract_strided_slice %245 {offsets = [1, 0], sizes = [1, 256], strides = [1, 1]} : vector<8x256xf32> to vector<1x256xf32>
    %253 = vector.broadcast %252 : vector<1x256xf32> to vector<8x256xf32>
    %254 = arith.mulf %247, %253 : vector<8x256xf32>
    %255 = arith.addf %244, %254 : vector<8x256xf32>
    %c5_98 = arith.constant 5 : index
    %c1_99 = arith.constant 1 : index
    %c0_100 = arith.constant 0 : index
    %c0_101 = arith.constant 0 : index
    %256 = vector.load %arg3[%c5_98, %c1_99, %c0_100, %c0_101] : memref<9x4x8x256xf32, #tpu.memory_space<vmem>>, vector<1x1x8x256xf32>
    %257 = vector.shape_cast %256 : vector<1x1x8x256xf32> to vector<8x256xf32>
    %258 = vector.extract_strided_slice %245 {offsets = [2, 0], sizes = [1, 256], strides = [1, 1]} : vector<8x256xf32> to vector<1x256xf32>
    %259 = vector.broadcast %258 : vector<1x256xf32> to vector<8x256xf32>
    %260 = arith.mulf %257, %259 : vector<8x256xf32>
    %261 = arith.addf %251, %260 : vector<8x256xf32>
    %262 = vector.extract_strided_slice %245 {offsets = [3, 0], sizes = [1, 256], strides = [1, 1]} : vector<8x256xf32> to vector<1x256xf32>
    %263 = vector.broadcast %262 : vector<1x256xf32> to vector<8x256xf32>
    %264 = arith.mulf %257, %263 : vector<8x256xf32>
    %265 = arith.addf %255, %264 : vector<8x256xf32>
    %c5_102 = arith.constant 5 : index
    %c2_103 = arith.constant 2 : index
    %c0_104 = arith.constant 0 : index
    %c0_105 = arith.constant 0 : index
    %266 = vector.load %arg3[%c5_102, %c2_103, %c0_104, %c0_105] : memref<9x4x8x256xf32, #tpu.memory_space<vmem>>, vector<1x1x8x256xf32>
    %267 = vector.shape_cast %266 : vector<1x1x8x256xf32> to vector<8x256xf32>
    %268 = vector.extract_strided_slice %245 {offsets = [4, 0], sizes = [1, 256], strides = [1, 1]} : vector<8x256xf32> to vector<1x256xf32>
    %269 = vector.broadcast %268 : vector<1x256xf32> to vector<8x256xf32>
    %270 = arith.mulf %267, %269 : vector<8x256xf32>
    %271 = arith.addf %261, %270 : vector<8x256xf32>
    %272 = vector.extract_strided_slice %245 {offsets = [5, 0], sizes = [1, 256], strides = [1, 1]} : vector<8x256xf32> to vector<1x256xf32>
    %273 = vector.broadcast %272 : vector<1x256xf32> to vector<8x256xf32>
    %274 = arith.mulf %267, %273 : vector<8x256xf32>
    %275 = arith.addf %265, %274 : vector<8x256xf32>
    %c5_106 = arith.constant 5 : index
    %c3_107 = arith.constant 3 : index
    %c0_108 = arith.constant 0 : index
    %c0_109 = arith.constant 0 : index
    %276 = vector.load %arg3[%c5_106, %c3_107, %c0_108, %c0_109] : memref<9x4x8x256xf32, #tpu.memory_space<vmem>>, vector<1x1x8x256xf32>
    %277 = vector.shape_cast %276 : vector<1x1x8x256xf32> to vector<8x256xf32>
    %278 = vector.extract_strided_slice %245 {offsets = [6, 0], sizes = [1, 256], strides = [1, 1]} : vector<8x256xf32> to vector<1x256xf32>
    %279 = vector.broadcast %278 : vector<1x256xf32> to vector<8x256xf32>
    %280 = arith.mulf %277, %279 : vector<8x256xf32>
    %281 = arith.addf %271, %280 : vector<8x256xf32>
    %282 = vector.extract_strided_slice %245 {offsets = [7, 0], sizes = [1, 256], strides = [1, 1]} : vector<8x256xf32> to vector<1x256xf32>
    %283 = vector.broadcast %282 : vector<1x256xf32> to vector<8x256xf32>
    %284 = arith.mulf %277, %283 : vector<8x256xf32>
    %285 = arith.addf %275, %284 : vector<8x256xf32>
    %c241_i32 = arith.constant 241 : i32
    %286 = tpu.dynamic_rotate %38 by %c241_i32 dim 1 : vector<8x256xf32>, i32 -> vector<8x256xf32>
    %c6 = arith.constant 6 : index
    %c0_110 = arith.constant 0 : index
    %c0_111 = arith.constant 0 : index
    %c0_112 = arith.constant 0 : index
    %287 = vector.load %arg3[%c6, %c0_110, %c0_111, %c0_112] : memref<9x4x8x256xf32, #tpu.memory_space<vmem>>, vector<1x1x8x256xf32>
    %288 = vector.shape_cast %287 : vector<1x1x8x256xf32> to vector<8x256xf32>
    %289 = vector.extract_strided_slice %286 {offsets = [0, 0], sizes = [1, 256], strides = [1, 1]} : vector<8x256xf32> to vector<1x256xf32>
    %290 = vector.broadcast %289 : vector<1x256xf32> to vector<8x256xf32>
    %291 = arith.mulf %288, %290 : vector<8x256xf32>
    %292 = arith.addf %281, %291 : vector<8x256xf32>
    %293 = vector.extract_strided_slice %286 {offsets = [1, 0], sizes = [1, 256], strides = [1, 1]} : vector<8x256xf32> to vector<1x256xf32>
    %294 = vector.broadcast %293 : vector<1x256xf32> to vector<8x256xf32>
    %295 = arith.mulf %288, %294 : vector<8x256xf32>
    %296 = arith.addf %285, %295 : vector<8x256xf32>
    %c6_113 = arith.constant 6 : index
    %c1_114 = arith.constant 1 : index
    %c0_115 = arith.constant 0 : index
    %c0_116 = arith.constant 0 : index
    %297 = vector.load %arg3[%c6_113, %c1_114, %c0_115, %c0_116] : memref<9x4x8x256xf32, #tpu.memory_space<vmem>>, vector<1x1x8x256xf32>
    %298 = vector.shape_cast %297 : vector<1x1x8x256xf32> to vector<8x256xf32>
    %299 = vector.extract_strided_slice %286 {offsets = [2, 0], sizes = [1, 256], strides = [1, 1]} : vector<8x256xf32> to vector<1x256xf32>
    %300 = vector.broadcast %299 : vector<1x256xf32> to vector<8x256xf32>
    %301 = arith.mulf %298, %300 : vector<8x256xf32>
    %302 = arith.addf %292, %301 : vector<8x256xf32>
    %303 = vector.extract_strided_slice %286 {offsets = [3, 0], sizes = [1, 256], strides = [1, 1]} : vector<8x256xf32> to vector<1x256xf32>
    %304 = vector.broadcast %303 : vector<1x256xf32> to vector<8x256xf32>
    %305 = arith.mulf %298, %304 : vector<8x256xf32>
    %306 = arith.addf %296, %305 : vector<8x256xf32>
    %c6_117 = arith.constant 6 : index
    %c2_118 = arith.constant 2 : index
    %c0_119 = arith.constant 0 : index
    %c0_120 = arith.constant 0 : index
    %307 = vector.load %arg3[%c6_117, %c2_118, %c0_119, %c0_120] : memref<9x4x8x256xf32, #tpu.memory_space<vmem>>, vector<1x1x8x256xf32>
    %308 = vector.shape_cast %307 : vector<1x1x8x256xf32> to vector<8x256xf32>
    %309 = vector.extract_strided_slice %286 {offsets = [4, 0], sizes = [1, 256], strides = [1, 1]} : vector<8x256xf32> to vector<1x256xf32>
    %310 = vector.broadcast %309 : vector<1x256xf32> to vector<8x256xf32>
    %311 = arith.mulf %308, %310 : vector<8x256xf32>
    %312 = arith.addf %302, %311 : vector<8x256xf32>
    %313 = vector.extract_strided_slice %286 {offsets = [5, 0], sizes = [1, 256], strides = [1, 1]} : vector<8x256xf32> to vector<1x256xf32>
    %314 = vector.broadcast %313 : vector<1x256xf32> to vector<8x256xf32>
    %315 = arith.mulf %308, %314 : vector<8x256xf32>
    %316 = arith.addf %306, %315 : vector<8x256xf32>
    %c6_121 = arith.constant 6 : index
    %c3_122 = arith.constant 3 : index
    %c0_123 = arith.constant 0 : index
    %c0_124 = arith.constant 0 : index
    %317 = vector.load %arg3[%c6_121, %c3_122, %c0_123, %c0_124] : memref<9x4x8x256xf32, #tpu.memory_space<vmem>>, vector<1x1x8x256xf32>
    %318 = vector.shape_cast %317 : vector<1x1x8x256xf32> to vector<8x256xf32>
    %319 = vector.extract_strided_slice %286 {offsets = [6, 0], sizes = [1, 256], strides = [1, 1]} : vector<8x256xf32> to vector<1x256xf32>
    %320 = vector.broadcast %319 : vector<1x256xf32> to vector<8x256xf32>
    %321 = arith.mulf %318, %320 : vector<8x256xf32>
    %322 = arith.addf %312, %321 : vector<8x256xf32>
    %323 = vector.extract_strided_slice %286 {offsets = [7, 0], sizes = [1, 256], strides = [1, 1]} : vector<8x256xf32> to vector<1x256xf32>
    %324 = vector.broadcast %323 : vector<1x256xf32> to vector<8x256xf32>
    %325 = arith.mulf %318, %324 : vector<8x256xf32>
    %326 = arith.addf %316, %325 : vector<8x256xf32>
    %c240_i32 = arith.constant 240 : i32
    %327 = tpu.dynamic_rotate %38 by %c240_i32 dim 1 : vector<8x256xf32>, i32 -> vector<8x256xf32>
    %c7 = arith.constant 7 : index
    %c0_125 = arith.constant 0 : index
    %c0_126 = arith.constant 0 : index
    %c0_127 = arith.constant 0 : index
    %328 = vector.load %arg3[%c7, %c0_125, %c0_126, %c0_127] : memref<9x4x8x256xf32, #tpu.memory_space<vmem>>, vector<1x1x8x256xf32>
    %329 = vector.shape_cast %328 : vector<1x1x8x256xf32> to vector<8x256xf32>
    %330 = vector.extract_strided_slice %327 {offsets = [0, 0], sizes = [1, 256], strides = [1, 1]} : vector<8x256xf32> to vector<1x256xf32>
    %331 = vector.broadcast %330 : vector<1x256xf32> to vector<8x256xf32>
    %332 = arith.mulf %329, %331 : vector<8x256xf32>
    %333 = arith.addf %322, %332 : vector<8x256xf32>
    %334 = vector.extract_strided_slice %327 {offsets = [1, 0], sizes = [1, 256], strides = [1, 1]} : vector<8x256xf32> to vector<1x256xf32>
    %335 = vector.broadcast %334 : vector<1x256xf32> to vector<8x256xf32>
    %336 = arith.mulf %329, %335 : vector<8x256xf32>
    %337 = arith.addf %326, %336 : vector<8x256xf32>
    %c7_128 = arith.constant 7 : index
    %c1_129 = arith.constant 1 : index
    %c0_130 = arith.constant 0 : index
    %c0_131 = arith.constant 0 : index
    %338 = vector.load %arg3[%c7_128, %c1_129, %c0_130, %c0_131] : memref<9x4x8x256xf32, #tpu.memory_space<vmem>>, vector<1x1x8x256xf32>
    %339 = vector.shape_cast %338 : vector<1x1x8x256xf32> to vector<8x256xf32>
    %340 = vector.extract_strided_slice %327 {offsets = [2, 0], sizes = [1, 256], strides = [1, 1]} : vector<8x256xf32> to vector<1x256xf32>
    %341 = vector.broadcast %340 : vector<1x256xf32> to vector<8x256xf32>
    %342 = arith.mulf %339, %341 : vector<8x256xf32>
    %343 = arith.addf %333, %342 : vector<8x256xf32>
    %344 = vector.extract_strided_slice %327 {offsets = [3, 0], sizes = [1, 256], strides = [1, 1]} : vector<8x256xf32> to vector<1x256xf32>
    %345 = vector.broadcast %344 : vector<1x256xf32> to vector<8x256xf32>
    %346 = arith.mulf %339, %345 : vector<8x256xf32>
    %347 = arith.addf %337, %346 : vector<8x256xf32>
    %c7_132 = arith.constant 7 : index
    %c2_133 = arith.constant 2 : index
    %c0_134 = arith.constant 0 : index
    %c0_135 = arith.constant 0 : index
    %348 = vector.load %arg3[%c7_132, %c2_133, %c0_134, %c0_135] : memref<9x4x8x256xf32, #tpu.memory_space<vmem>>, vector<1x1x8x256xf32>
    %349 = vector.shape_cast %348 : vector<1x1x8x256xf32> to vector<8x256xf32>
    %350 = vector.extract_strided_slice %327 {offsets = [4, 0], sizes = [1, 256], strides = [1, 1]} : vector<8x256xf32> to vector<1x256xf32>
    %351 = vector.broadcast %350 : vector<1x256xf32> to vector<8x256xf32>
    %352 = arith.mulf %349, %351 : vector<8x256xf32>
    %353 = arith.addf %343, %352 : vector<8x256xf32>
    %354 = vector.extract_strided_slice %327 {offsets = [5, 0], sizes = [1, 256], strides = [1, 1]} : vector<8x256xf32> to vector<1x256xf32>
    %355 = vector.broadcast %354 : vector<1x256xf32> to vector<8x256xf32>
    %356 = arith.mulf %349, %355 : vector<8x256xf32>
    %357 = arith.addf %347, %356 : vector<8x256xf32>
    %c7_136 = arith.constant 7 : index
    %c3_137 = arith.constant 3 : index
    %c0_138 = arith.constant 0 : index
    %c0_139 = arith.constant 0 : index
    %358 = vector.load %arg3[%c7_136, %c3_137, %c0_138, %c0_139] : memref<9x4x8x256xf32, #tpu.memory_space<vmem>>, vector<1x1x8x256xf32>
    %359 = vector.shape_cast %358 : vector<1x1x8x256xf32> to vector<8x256xf32>
    %360 = vector.extract_strided_slice %327 {offsets = [6, 0], sizes = [1, 256], strides = [1, 1]} : vector<8x256xf32> to vector<1x256xf32>
    %361 = vector.broadcast %360 : vector<1x256xf32> to vector<8x256xf32>
    %362 = arith.mulf %359, %361 : vector<8x256xf32>
    %363 = arith.addf %353, %362 : vector<8x256xf32>
    %364 = vector.extract_strided_slice %327 {offsets = [7, 0], sizes = [1, 256], strides = [1, 1]} : vector<8x256xf32> to vector<1x256xf32>
    %365 = vector.broadcast %364 : vector<1x256xf32> to vector<8x256xf32>
    %366 = arith.mulf %359, %365 : vector<8x256xf32>
    %367 = arith.addf %357, %366 : vector<8x256xf32>
    %c239_i32 = arith.constant 239 : i32
    %368 = tpu.dynamic_rotate %38 by %c239_i32 dim 1 : vector<8x256xf32>, i32 -> vector<8x256xf32>
    %c8 = arith.constant 8 : index
    %c0_140 = arith.constant 0 : index
    %c0_141 = arith.constant 0 : index
    %c0_142 = arith.constant 0 : index
    %369 = vector.load %arg3[%c8, %c0_140, %c0_141, %c0_142] : memref<9x4x8x256xf32, #tpu.memory_space<vmem>>, vector<1x1x8x256xf32>
    %370 = vector.shape_cast %369 : vector<1x1x8x256xf32> to vector<8x256xf32>
    %371 = vector.extract_strided_slice %368 {offsets = [0, 0], sizes = [1, 256], strides = [1, 1]} : vector<8x256xf32> to vector<1x256xf32>
    %372 = vector.broadcast %371 : vector<1x256xf32> to vector<8x256xf32>
    %373 = arith.mulf %370, %372 : vector<8x256xf32>
    %374 = arith.addf %363, %373 : vector<8x256xf32>
    %375 = vector.extract_strided_slice %368 {offsets = [1, 0], sizes = [1, 256], strides = [1, 1]} : vector<8x256xf32> to vector<1x256xf32>
    %376 = vector.broadcast %375 : vector<1x256xf32> to vector<8x256xf32>
    %377 = arith.mulf %370, %376 : vector<8x256xf32>
    %378 = arith.addf %367, %377 : vector<8x256xf32>
    %c8_143 = arith.constant 8 : index
    %c1_144 = arith.constant 1 : index
    %c0_145 = arith.constant 0 : index
    %c0_146 = arith.constant 0 : index
    %379 = vector.load %arg3[%c8_143, %c1_144, %c0_145, %c0_146] : memref<9x4x8x256xf32, #tpu.memory_space<vmem>>, vector<1x1x8x256xf32>
    %380 = vector.shape_cast %379 : vector<1x1x8x256xf32> to vector<8x256xf32>
    %381 = vector.extract_strided_slice %368 {offsets = [2, 0], sizes = [1, 256], strides = [1, 1]} : vector<8x256xf32> to vector<1x256xf32>
    %382 = vector.broadcast %381 : vector<1x256xf32> to vector<8x256xf32>
    %383 = arith.mulf %380, %382 : vector<8x256xf32>
    %384 = arith.addf %374, %383 : vector<8x256xf32>
    %385 = vector.extract_strided_slice %368 {offsets = [3, 0], sizes = [1, 256], strides = [1, 1]} : vector<8x256xf32> to vector<1x256xf32>
    %386 = vector.broadcast %385 : vector<1x256xf32> to vector<8x256xf32>
    %387 = arith.mulf %380, %386 : vector<8x256xf32>
    %388 = arith.addf %378, %387 : vector<8x256xf32>
    %c8_147 = arith.constant 8 : index
    %c2_148 = arith.constant 2 : index
    %c0_149 = arith.constant 0 : index
    %c0_150 = arith.constant 0 : index
    %389 = vector.load %arg3[%c8_147, %c2_148, %c0_149, %c0_150] : memref<9x4x8x256xf32, #tpu.memory_space<vmem>>, vector<1x1x8x256xf32>
    %390 = vector.shape_cast %389 : vector<1x1x8x256xf32> to vector<8x256xf32>
    %391 = vector.extract_strided_slice %368 {offsets = [4, 0], sizes = [1, 256], strides = [1, 1]} : vector<8x256xf32> to vector<1x256xf32>
    %392 = vector.broadcast %391 : vector<1x256xf32> to vector<8x256xf32>
    %393 = arith.mulf %390, %392 : vector<8x256xf32>
    %394 = arith.addf %384, %393 : vector<8x256xf32>
    %395 = vector.extract_strided_slice %368 {offsets = [5, 0], sizes = [1, 256], strides = [1, 1]} : vector<8x256xf32> to vector<1x256xf32>
    %396 = vector.broadcast %395 : vector<1x256xf32> to vector<8x256xf32>
    %397 = arith.mulf %390, %396 : vector<8x256xf32>
    %398 = arith.addf %388, %397 : vector<8x256xf32>
    %c8_151 = arith.constant 8 : index
    %c3_152 = arith.constant 3 : index
    %c0_153 = arith.constant 0 : index
    %c0_154 = arith.constant 0 : index
    %399 = vector.load %arg3[%c8_151, %c3_152, %c0_153, %c0_154] : memref<9x4x8x256xf32, #tpu.memory_space<vmem>>, vector<1x1x8x256xf32>
    %400 = vector.shape_cast %399 : vector<1x1x8x256xf32> to vector<8x256xf32>
    %401 = vector.extract_strided_slice %368 {offsets = [6, 0], sizes = [1, 256], strides = [1, 1]} : vector<8x256xf32> to vector<1x256xf32>
    %402 = vector.broadcast %401 : vector<1x256xf32> to vector<8x256xf32>
    %403 = arith.mulf %400, %402 : vector<8x256xf32>
    %404 = arith.addf %394, %403 : vector<8x256xf32>
    %405 = vector.extract_strided_slice %368 {offsets = [7, 0], sizes = [1, 256], strides = [1, 1]} : vector<8x256xf32> to vector<1x256xf32>
    %406 = vector.broadcast %405 : vector<1x256xf32> to vector<8x256xf32>
    %407 = arith.mulf %400, %406 : vector<8x256xf32>
    %408 = arith.addf %398, %407 : vector<8x256xf32>
    %cst_155 = arith.constant dense<0.000000e+00> : vector<8xf32>
    %409 = vector.multi_reduction <add>, %404, %cst_155 [1] : vector<8x256xf32> to vector<8xf32>
    %410 = vector.shape_cast %409 : vector<8xf32> to vector<8x1xf32>
    %cst_156 = arith.constant dense<0.000000e+00> : vector<8xf32>
    %411 = vector.multi_reduction <add>, %408, %cst_156 [1] : vector<8x256xf32> to vector<8xf32>
    %412 = vector.shape_cast %411 : vector<8xf32> to vector<8x1xf32>
    %413 = arith.addf %410, %412 : vector<8x1xf32>
    %cst_157 = arith.constant 0.001953125 : f32
    %414 = vector.broadcast %cst_157 : f32 to vector<8x1xf32>
    %415 = arith.mulf %413, %414 : vector<8x1xf32>
    %416 = vector.broadcast %415 : vector<8x1xf32> to vector<8x256xf32>
    %417 = arith.subf %404, %416 : vector<8x256xf32>
    %418 = arith.mulf %417, %417 : vector<8x256xf32>
    %cst_158 = arith.constant dense<0.000000e+00> : vector<8xf32>
    %419 = vector.multi_reduction <add>, %418, %cst_158 [1] : vector<8x256xf32> to vector<8xf32>
    %420 = vector.shape_cast %419 : vector<8xf32> to vector<8x1xf32>
    %421 = vector.broadcast %415 : vector<8x1xf32> to vector<8x256xf32>
    %422 = arith.subf %408, %421 : vector<8x256xf32>
    %423 = arith.mulf %422, %422 : vector<8x256xf32>
    %cst_159 = arith.constant dense<0.000000e+00> : vector<8xf32>
    %424 = vector.multi_reduction <add>, %423, %cst_159 [1] : vector<8x256xf32> to vector<8xf32>
    %425 = vector.shape_cast %424 : vector<8xf32> to vector<8x1xf32>
    %426 = arith.addf %420, %425 : vector<8x1xf32>
    %cst_160 = arith.constant 0.001953125 : f32
    %427 = vector.broadcast %cst_160 : f32 to vector<8x1xf32>
    %428 = arith.mulf %426, %427 : vector<8x1xf32>
    %c0_161 = arith.constant 0 : index
    %c0_162 = arith.constant 0 : index
    %429 = vector.load %arg4[%c0_161, %c0_162] : memref<8x1xf32, #tpu.memory_space<vmem>>, vector<8x1xf32>
    %cst_163 = arith.constant 9.99999974E-6 : f32
    %430 = vector.broadcast %cst_163 : f32 to vector<8x1xf32>
    %431 = arith.addf %428, %430 : vector<8x1xf32>
    %432 = math.rsqrt %431 : vector<8x1xf32>
    %433 = arith.mulf %429, %432 : vector<8x1xf32>
    %c0_164 = arith.constant 0 : index
    %c0_165 = arith.constant 0 : index
    %434 = vector.load %arg5[%c0_164, %c0_165] : memref<8x1xf32, #tpu.memory_space<vmem>>, vector<8x1xf32>
    %435 = arith.mulf %415, %433 : vector<8x1xf32>
    %436 = arith.subf %434, %435 : vector<8x1xf32>
    %437 = vector.broadcast %433 : vector<8x1xf32> to vector<8x256xf32>
    %438 = arith.mulf %404, %437 : vector<8x256xf32>
    %439 = vector.broadcast %436 : vector<8x1xf32> to vector<8x256xf32>
    %440 = arith.addf %438, %439 : vector<8x256xf32>
    %cst_166 = arith.constant 0.000000e+00 : f32
    %441 = vector.broadcast %cst_166 : f32 to vector<8x256xf32>
    %442 = arith.maximumf %440, %441 : vector<8x256xf32>
    %c0_167 = arith.constant 0 : index
    %c0_168 = arith.constant 0 : index
    %c0_169 = arith.constant 0 : index
    %443 = vector.load %arg6[%c0_167, %c0_168, %c0_169] : memref<2x8x256xf32, #tpu.memory_space<vmem>>, vector<1x8x256xf32>
    %444 = vector.shape_cast %443 : vector<1x8x256xf32> to vector<8x256xf32>
    %445 = vector.shape_cast %442 : vector<8x256xf32> to vector<1x8x256xf32>
    tpu.vector_store %arg6[%c0_167, %c0_168, %c0_169], %445 {strides = array<i32>} : memref<2x8x256xf32, #tpu.memory_space<vmem>>, vector<1x8x256xf32>,
    %446 = vector.broadcast %433 : vector<8x1xf32> to vector<8x256xf32>
    %447 = arith.mulf %408, %446 : vector<8x256xf32>
    %448 = vector.broadcast %436 : vector<8x1xf32> to vector<8x256xf32>
    %449 = arith.addf %447, %448 : vector<8x256xf32>
    %cst_170 = arith.constant 0.000000e+00 : f32
    %450 = vector.broadcast %cst_170 : f32 to vector<8x256xf32>
    %451 = arith.maximumf %449, %450 : vector<8x256xf32>
    %c1_171 = arith.constant 1 : index
    %c0_172 = arith.constant 0 : index
    %c0_173 = arith.constant 0 : index
    %452 = vector.load %arg6[%c1_171, %c0_172, %c0_173] : memref<2x8x256xf32, #tpu.memory_space<vmem>>, vector<1x8x256xf32>
    %453 = vector.shape_cast %452 : vector<1x8x256xf32> to vector<8x256xf32>
    %454 = vector.shape_cast %451 : vector<8x256xf32> to vector<1x8x256xf32>
    tpu.vector_store %arg6[%c1_171, %c0_172, %c0_173], %454 {strides = array<i32>} : memref<2x8x256xf32, #tpu.memory_space<vmem>>, vector<1x8x256xf32>,
    return
  }
  func.func @transform_0(%arg0: i32) -> (i32, i32, i32) {
    %c0_i32 = arith.constant 0 : i32
    %c0_i32_0 = arith.constant 0 : i32
    %c0_i32_1 = arith.constant 0 : i32
    %c0_i32_2 = arith.constant 0 : i32
    return %c0_i32, %c0_i32_0, %c0_i32_1 : i32, i32, i32
  }
  func.func @transform_1(%arg0: i32) -> (i32, i32, i32) {
    %c0_i32 = arith.constant 0 : i32
    %c0_i32_0 = arith.constant 0 : i32
    %c0_i32_1 = arith.constant 0 : i32
    %c0_i32_2 = arith.constant 0 : i32
    return %c0_i32, %c0_i32_0, %c0_i32_1 : i32, i32, i32
  }
  func.func @transform_2(%arg0: i32) -> (i32, i32, i32, i32) {
    %c0_i32 = arith.constant 0 : i32
    %c0_i32_0 = arith.constant 0 : i32
    %c0_i32_1 = arith.constant 0 : i32
    %c0_i32_2 = arith.constant 0 : i32
    %c0_i32_3 = arith.constant 0 : i32
    return %c0_i32, %c0_i32_0, %c0_i32_1, %c0_i32_2 : i32, i32, i32, i32
  }
  func.func @transform_3(%arg0: i32) -> (i32, i32) {
    %c0_i32 = arith.constant 0 : i32
    %c0_i32_0 = arith.constant 0 : i32
    %c0_i32_1 = arith.constant 0 : i32
    return %c0_i32, %c0_i32_0 : i32, i32
  }
  func.func @transform_4(%arg0: i32) -> (i32, i32) {
    %c0_i32 = arith.constant 0 : i32
    %c0_i32_0 = arith.constant 0 : i32
    %c0_i32_1 = arith.constant 0 : i32
    return %c0_i32, %c0_i32_0 : i32, i32
  }
  func.func @transform_5(%arg0: i32) -> (i32, i32, i32) {
    %c0_i32 = arith.constant 0 : i32
    %c0_i32_0 = arith.constant 0 : i32
    %c0_i32_1 = arith.constant 0 : i32
    %c0_i32_2 = arith.constant 0 : i32
    return %c0_i32, %c0_i32_0, %c0_i32_1 : i32, i32, i32
  }
}

</mosaic_0001>

<llo_original>
// kernel: dconv_3x3.1
$region0: #{dconv_3x3.1}
  #allocation0 [shape = 'u32[]', space=smem, size = 0x4, offset = 0x4, fixed_abs, tag = 'smem constant byte address 0x4 - core index']
  #allocation1 [shape = 'u32[144,128]{1,0:T(1,128)}', space=vmem, size = 0x12000, scoped, tag = 'internal scratch']
  %s0 = inlined_call_operand.vmem [shape: f32[2,4,256], index: 0, kind: input, shape index: {}]
  %s1 = inlined_call_operand.hbm [shape: bf16[4,256,256], index: 1, kind: input, shape index: {}]
  %s2 = inlined_call_operand.hbm [shape: f32[9,4,8,256], index: 2, kind: input, shape index: {}]
  %s3 = inlined_call_operand.vmem [shape: f32[8,1], index: 3, kind: input, shape index: {}]
  %s4 = inlined_call_operand.vmem [shape: f32[8,1], index: 4, kind: input, shape index: {}]
  %s5 = inlined_call_operand.vmem [shape: f32[2,8,256], index: 5, kind: output, shape index: {}]
  %s6 = sld [smem:[#allocation0]]
  $region38: #{dconv_3x3.1} parent=0
    _
  %s8 = ssub.s32 1, %s6
  %s9 = scalar_select 0, %s8, %s6
  $region1: #{dconv_3x3.1} parent=0
    #allocation2 [shape = 'u8[524288]{0}', space=vmem, size = 0x80000, scoped, tag = 'input window, operand 1, single buffered']
    #allocation3 [shape = 's32[1]{0}', space=sflag, size = 0x4, scoped, tag = 'scoped memory for dconv_3x3.1']
    #allocation4 [shape = 'u8[294912]{0}', space=vmem, size = 0x48000, scoped, tag = 'input window, operand 2, single buffered']
    #allocation5 [shape = 's32[1]{0}', space=sflag, size = 0x4, scoped, tag = 'scoped memory for dconv_3x3.1']
    %10 = vsyncpa [#allocation3], 0
    %11 = vsyncpa [#allocation5], 0
    // Predicated region
    $region2: #{dconv_3x3.1} parent=1 // pred_check
      _
    $region3: #{dconv_3x3.1} parent=1 // pred_check_branch
      %13 = sbr.rel (0) target = $region5
    $region4: #{dconv_3x3.1} parent=1 // pred_region
      _
    $region5: #{dconv_3x3.1} parent=1 // pred_fallthru
      _
    // Predicated region
    $region6: #{dconv_3x3.1} parent=1 // pred_check
      _
    $region7: #{dconv_3x3.1} parent=1 // pred_check_branch
      %15 = sbr.rel (0) target = $region9
    $region8: #{dconv_3x3.1} parent=1 // pred_region
      %s17 = ssub.s32 16384, 16384
      %18 = vsyncadd [#allocation3], %s17
      %s19 = sshll.u32 [#allocation2], 4
      %s20 = int_to_ptr.vmem [resolvable:$true] %s19
      %25 = dma.hbm_to_vmem [thread:$0]  %s1, 16384, %s20, [#allocation3], 128, 128, 8
    $region9: #{dconv_3x3.1} parent=1 // pred_fallthru
      _
    // Predicated region
    $region10: #{dconv_3x3.1} parent=1 // pred_check
      _
    $region11: #{dconv_3x3.1} parent=1 // pred_check_branch
      %27 = sbr.rel (0) target = $region13
    $region12: #{dconv_3x3.1} parent=1 // pred_region
      %s29 = ssub.s32 9216, 9216
      %30 = vsyncadd [#allocation5], %s29
      %s31 = sshll.u32 [#allocation4], 4
      %s32 = int_to_ptr.vmem [resolvable:$true] %s31
      %37 = dma.hbm_to_vmem [thread:$0]  %s2, 9216, %s32, [#allocation5], 256, 256, 16
    $region13: #{dconv_3x3.1} parent=1 // pred_fallthru
      _
    // Predicated region
    $region14: #{dconv_3x3.1} parent=1 // pred_check
      _
    $region15: #{dconv_3x3.1} parent=1 // pred_check_branch
      %39 = sbr.rel (0) target = $region17
    $region16: #{dconv_3x3.1} parent=1 // pred_region
      _
    $region17: #{dconv_3x3.1} parent=1 // pred_fallthru
      _
    // Predicated region
    $region18: #{dconv_3x3.1} parent=1 // pred_check
      _
    $region19: #{dconv_3x3.1} parent=1 // pred_check_branch
      %41 = sbr.rel (0) target = $region21
    $region20: #{dconv_3x3.1} parent=1 // pred_region
      _
    $region21: #{dconv_3x3.1} parent=1 // pred_fallthru
      _
    // Predicated region
    $region22: #{dconv_3x3.1} parent=1 // pred_check
      _
    $region23: #{dconv_3x3.1} parent=1 // pred_check_branch
      %43 = sbr.rel (0) target = $region25
    $region24: #{dconv_3x3.1} parent=1 // pred_region
      %44 = dma.done [#allocation3], 16384
    $region25: #{dconv_3x3.1} parent=1 // pred_fallthru
      _
    // Predicated region
    $region26: #{dconv_3x3.1} parent=1 // pred_check
      _
    $region27: #{dconv_3x3.1} parent=1 // pred_check_branch
      %46 = sbr.rel (0) target = $region29
    $region28: #{dconv_3x3.1} parent=1 // pred_region
      %47 = dma.done [#allocation5], 9216
    $region29: #{dconv_3x3.1} parent=1 // pred_fallthru
      _
    %v48 = vld [vmem:[%s0] sm:$0xff]
    %v49 = vld [vmem:[%s0 + $0x8] sm:$0xff]
    %v52 = vcombine.high %v48, %v48
    %v53 = vcombine.high %v49, %v49
    %v56 = vpack.c.bf16 %v48, %v48
    %v57 = vpack.c.bf16 %v52, %v52
    %v58 = vpack.c.bf16 %v49, %v49
    %v59 = vpack.c.bf16 %v53, %v53
    %v60 = vunpack.c.l.bf16 %v56
    %v61 = vunpack.c.l.bf16 %v57
    %v62 = vunpack.c.l.bf16 %v58
    %v63 = vunpack.c.l.bf16 %v59
    %v68 = vcombine.low %v60, %v61
    %v69 = vcombine.low %v62, %v63
    %v72 = vsub.f32 %v48, %v68
    %v73 = vsub.f32 %v49, %v69
    %v76 = vcombine.high %v72, %v72
    %v77 = vcombine.high %v73, %v73
    %v80 = vpack.c.bf16 %v72, %v72
    %v81 = vpack.c.bf16 %v76, %v76
    %v82 = vpack.c.bf16 %v73, %v73
    %v83 = vpack.c.bf16 %v77, %v77
    %v84 = vld [vmem:[#allocation2] sm:$0xff]
    %v85 = vld [vmem:[#allocation2 + $0x8] sm:$0xff]
    %v86 = vld [vmem:[#allocation2 + $0x10] sm:$0xff]
    %v87 = vld [vmem:[#allocation2 + $0x18] sm:$0xff]
    %v88 = vld [vmem:[#allocation2 + $0x20] sm:$0xff]
    %v89 = vld [vmem:[#allocation2 + $0x28] sm:$0xff]
    %v90 = vld [vmem:[#allocation2 + $0x30] sm:$0xff]
    %v91 = vld [vmem:[#allocation2 + $0x38] sm:$0xff]
    %v92 = vld [vmem:[#allocation2 + $0x40] sm:$0xff]
    %v93 = vld [vmem:[#allocation2 + $0x48] sm:$0xff]
    %v94 = vld [vmem:[#allocation2 + $0x50] sm:$0xff]
    %v95 = vld [vmem:[#allocation2 + $0x58] sm:$0xff]
    %v96 = vld [vmem:[#allocation2 + $0x60] sm:$0xff]
    %v97 = vld [vmem:[#allocation2 + $0x68] sm:$0xff]
    %v98 = vld [vmem:[#allocation2 + $0x70] sm:$0xff]
    %v99 = vld [vmem:[#allocation2 + $0x78] sm:$0xff]
    %v100 = vld [vmem:[#allocation2 + $0x80] sm:$0xff]
    %v101 = vld [vmem:[#allocation2 + $0x88] sm:$0xff]
    %v102 = vld [vmem:[#allocation2 + $0x90] sm:$0xff]
    %v103 = vld [vmem:[#allocation2 + $0x98] sm:$0xff]
    %v104 = vld [vmem:[#allocation2 + $0xa0] sm:$0xff]
    %v105 = vld [vmem:[#allocation2 + $0xa8] sm:$0xff]
    %v106 = vld [vmem:[#allocation2 + $0xb0] sm:$0xff]
    %v107 = vld [vmem:[#allocation2 + $0xb8] sm:$0xff]
    %v108 = vld [vmem:[#allocation2 + $0xc0] sm:$0xff]
    %v109 = vld [vmem:[#allocation2 + $0xc8] sm:$0xff]
    %v110 = vld [vmem:[#allocation2 + $0xd0] sm:$0xff]
    %v111 = vld [vmem:[#allocation2 + $0xd8] sm:$0xff]
    %v112 = vld [vmem:[#allocation2 + $0xe0] sm:$0xff]
    %v113 = vld [vmem:[#allocation2 + $0xe8] sm:$0xff]
    %v114 = vld [vmem:[#allocation2 + $0xf0] sm:$0xff]
    %v115 = vld [vmem:[#allocation2 + $0xf8] sm:$0xff]
    %v124 = vunpack.c.l.b16 %v56
    %v125 = vunpack.c.l.b16 %v57
    %v126 = vunpack.c.l.b16 %v58
    %v127 = vunpack.c.l.b16 %v59
    %v128 = vunpack.c.l.b16 %v80
    %v129 = vunpack.c.l.b16 %v81
    %v130 = vunpack.c.l.b16 %v82
    %v131 = vunpack.c.l.b16 %v83
    %v132 = vrot.slane %v126, 7
    %vm133 = vcmask 1041409
    %v134 = vsel %vm133, %v132, %v124
    %v135 = vrot.slane %v128, 6
    %vm136 = vcmask 1042434
    %v137 = vsel %vm136, %v135, %v134
    %v138 = vrot.slane %v130, 5
    %vm139 = vcmask 1043459
    %v140 = vsel %vm139, %v138, %v137
    %v141 = vrot.slane %v127, 7
    %v142 = vsel %vm133, %v141, %v125
    %v143 = vrot.slane %v129, 6
    %v144 = vsel %vm136, %v143, %v142
    %v145 = vrot.slane %v131, 5
    %v146 = vsel %vm139, %v145, %v144
    %v147 = vpack.c.b16 %v140, %v140
    %v148 = vpack.c.b16 %v146, %v146
    %v183 = vunpack.c.l.b16 %v84
    %v184 = vunpack.c.h.b16 %v84
    %v185 = vunpack.c.l.b16 %v85
    %v186 = vunpack.c.h.b16 %v85
    %v187 = vunpack.c.l.b16 %v86
    %v188 = vunpack.c.h.b16 %v86
    %v189 = vunpack.c.l.b16 %v87
    %v190 = vunpack.c.h.b16 %v87
    %v191 = vunpack.c.l.b16 %v88
    %v192 = vunpack.c.h.b16 %v88
    %v193 = vunpack.c.l.b16 %v89
    %v194 = vunpack.c.h.b16 %v89
    %v195 = vunpack.c.l.b16 %v90
    %v196 = vunpack.c.h.b16 %v90
    %v197 = vunpack.c.l.b16 %v91
    %v198 = vunpack.c.h.b16 %v91
    %v199 = vunpack.c.l.b16 %v92
    %v200 = vunpack.c.h.b16 %v92
    %v201 = vunpack.c.l.b16 %v93
    %v202 = vunpack.c.h.b16 %v93
    %v203 = vunpack.c.l.b16 %v94
    %v204 = vunpack.c.h.b16 %v94
    %v205 = vunpack.c.l.b16 %v95
    %v206 = vunpack.c.h.b16 %v95
    %v207 = vunpack.c.l.b16 %v96
    %v208 = vunpack.c.h.b16 %v96
    %v209 = vunpack.c.l.b16 %v97
    %v210 = vunpack.c.h.b16 %v97
    %v211 = vunpack.c.l.b16 %v98
    %v212 = vunpack.c.h.b16 %v98
    %v213 = vunpack.c.l.b16 %v99
    %v214 = vunpack.c.h.b16 %v99
    %v215 = vunpack.c.l.b16 %v100
    %v216 = vunpack.c.h.b16 %v100
    %v217 = vunpack.c.l.b16 %v101
    %v218 = vunpack.c.h.b16 %v101
    %v219 = vunpack.c.l.b16 %v102
    %v220 = vunpack.c.h.b16 %v102
    %v221 = vunpack.c.l.b16 %v103
    %v222 = vunpack.c.h.b16 %v103
    %v223 = vunpack.c.l.b16 %v104
    %v224 = vunpack.c.h.b16 %v104
    %v225 = vunpack.c.l.b16 %v105
    %v226 = vunpack.c.h.b16 %v105
    %v227 = vunpack.c.l.b16 %v106
    %v228 = vunpack.c.h.b16 %v106
    %v229 = vunpack.c.l.b16 %v107
    %v230 = vunpack.c.h.b16 %v107
    %v231 = vunpack.c.l.b16 %v108
    %v232 = vunpack.c.h.b16 %v108
    %v233 = vunpack.c.l.b16 %v109
    %v234 = vunpack.c.h.b16 %v109
    %v235 = vunpack.c.l.b16 %v110
    %v236 = vunpack.c.h.b16 %v110
    %v237 = vunpack.c.l.b16 %v111
    %v238 = vunpack.c.h.b16 %v111
    %v239 = vunpack.c.l.b16 %v112
    %v240 = vunpack.c.h.b16 %v112
    %v241 = vunpack.c.l.b16 %v113
    %v242 = vunpack.c.h.b16 %v113
    %v243 = vunpack.c.l.b16 %v114
    %v244 = vunpack.c.h.b16 %v114
    %v245 = vunpack.c.l.b16 %v115
    %v246 = vunpack.c.h.b16 %v115
    %v247 = vpack.c.b16 %v185, %v183
    %v248 = vpack.c.b16 %v186, %v184
    %v249 = vpack.c.b16 %v189, %v187
    %v250 = vpack.c.b16 %v190, %v188
    %v251 = vpack.c.b16 %v193, %v191
    %v252 = vpack.c.b16 %v194, %v192
    %v253 = vpack.c.b16 %v197, %v195
    %v254 = vpack.c.b16 %v198, %v196
    %v255 = vpack.c.b16 %v201, %v199
    %v256 = vpack.c.b16 %v202, %v200
    %v257 = vpack.c.b16 %v205, %v203
    %v258 = vpack.c.b16 %v206, %v204
    %v259 = vpack.c.b16 %v209, %v207
    %v260 = vpack.c.b16 %v210, %v208
    %v261 = vpack.c.b16 %v213, %v211
    %v262 = vpack.c.b16 %v214, %v212
    %v263 = vpack.c.b16 %v217, %v215
    %v264 = vpack.c.b16 %v218, %v216
    %v265 = vpack.c.b16 %v221, %v219
    %v266 = vpack.c.b16 %v222, %v220
    %v267 = vpack.c.b16 %v225, %v223
    %v268 = vpack.c.b16 %v226, %v224
    %v269 = vpack.c.b16 %v229, %v227
    %v270 = vpack.c.b16 %v230, %v228
    %v271 = vpack.c.b16 %v233, %v231
    %v272 = vpack.c.b16 %v234, %v232
    %v273 = vpack.c.b16 %v237, %v235
    %v274 = vpack.c.b16 %v238, %v236
    %v275 = vpack.c.b16 %v241, %v239
    %v276 = vpack.c.b16 %v242, %v240
    %v277 = vpack.c.b16 %v245, %v243
    %v278 = vpack.c.b16 %v246, %v244
    %311 = vmatprep.subr.bf16.mxu0 %v248
    %312 = vmatpush1.bf16.msra.mxu0 %v247
    %313 = vmatprep.subr.bf16.mxu0 %v250
    %314 = vmatpush1.bf16.msra.mxu0 %v249
    %315 = vmatprep.subr.bf16.mxu0 %v252
    %316 = vmatpush1.bf16.msra.mxu0 %v251
    %317 = vmatprep.subr.bf16.mxu0 %v254
    %318 = vmatpush1.bf16.msra.mxu0 %v253
    %319 = vmatprep.subr.bf16.mxu0 %v256
    %320 = vmatpush1.bf16.msra.mxu0 %v255
    %321 = vmatprep.subr.bf16.mxu0 %v258
    %322 = vmatpush1.bf16.msra.mxu0 %v257
    %323 = vmatprep.subr.bf16.mxu0 %v260
    %324 = vmatpush1.bf16.msra.mxu0 %v259
    %325 = vmatprep.subr.bf16.mxu0 %v262
    %326 = vmatpush1.bf16.msra.mxu0 %v261
    %327 = vmatprep.subr.bf16.mxu0 %v264
    %328 = vmatpush1.bf16.msra.mxu0 %v263
    %329 = vmatprep.subr.bf16.mxu0 %v266
    %330 = vmatpush1.bf16.msra.mxu0 %v265
    %331 = vmatprep.subr.bf16.mxu0 %v268
    %332 = vmatpush1.bf16.msra.mxu0 %v267
    %333 = vmatprep.subr.bf16.mxu0 %v270
    %334 = vmatpush1.bf16.msra.mxu0 %v269
    %335 = vmatprep.subr.bf16.mxu0 %v272
    %336 = vmatpush1.bf16.msra.mxu0 %v271
    %337 = vmatprep.subr.bf16.mxu0 %v274
    %338 = vmatpush1.bf16.msra.mxu0 %v273
    %339 = vmatprep.subr.bf16.mxu0 %v276
    %340 = vmatpush1.bf16.msra.mxu0 %v275
    %341 = vmatprep.subr.bf16.mxu0 %v278
    %342 = vmatpush1.bf16.msra.mxu0 %v277
    %343 = vmatprep.mubr.bf16.mxu0 %v148
    %344 = vmatmul.mubr.bf16.gmra.mrb[0].mxu0 %v147
    %v345 = vpop.f32.mrb[0].mxu0
    %v346 = vadd.f32 0.0, %v345
    %v347 = vpop.f32.mrb[0].mxu0
    %v348 = vadd.f32 0.0, %v347
    %v349 = vpop.f32.mrb[0].mxu0
    %v350 = vpop.f32.mrb[0].mxu0
    %351 = vdwg.mxu0
    %v354 = vrot.slane %v346, 2
    %v355 = vrot.slane %v348, 2
    %v358 = vadd.f32 %v346, %v354
    %v359 = vadd.f32 %v348, %v355
    %s360 = scalar_lea.vmem [#allocation2], 256
    %v361 = vld [vmem:[%s360] sm:$0xff]
    %v362 = vld [vmem:[%s360 + $0x8] sm:$0xff]
    %v363 = vld [vmem:[%s360 + $0x10] sm:$0xff]
    %v364 = vld [vmem:[%s360 + $0x18] sm:$0xff]
    %v365 = vld [vmem:[%s360 + $0x20] sm:$0xff]
    %v366 = vld [vmem:[%s360 + $0x28] sm:$0xff]
    %v367 = vld [vmem:[%s360 + $0x30] sm:$0xff]
    %v368 = vld [vmem:[%s360 + $0x38] sm:$0xff]
    %v369 = vld [vmem:[%s360 + $0x40] sm:$0xff]
    %v370 = vld [vmem:[%s360 + $0x48] sm:$0xff]
    %v371 = vld [vmem:[%s360 + $0x50] sm:$0xff]
    %v372 = vld [vmem:[%s360 + $0x58] sm:$0xff]
    %v373 = vld [vmem:[%s360 + $0x60] sm:$0xff]
    %v374 = vld [vmem:[%s360 + $0x68] sm:$0xff]
    %v375 = vld [vmem:[%s360 + $0x70] sm:$0xff]
    %v376 = vld [vmem:[%s360 + $0x78] sm:$0xff]
    %v377 = vld [vmem:[%s360 + $0x80] sm:$0xff]
    %v378 = vld [vmem:[%s360 + $0x88] sm:$0xff]
    %v379 = vld [vmem:[%s360 + $0x90] sm:$0xff]
    %v380 = vld [vmem:[%s360 + $0x98] sm:$0xff]
    %v381 = vld [vmem:[%s360 + $0xa0] sm:$0xff]
    %v382 = vld [vmem:[%s360 + $0xa8] sm:$0xff]
    %v383 = vld [vmem:[%s360 + $0xb0] sm:$0xff]
    %v384 = vld [vmem:[%s360 + $0xb8] sm:$0xff]
    %v385 = vld [vmem:[%s360 + $0xc0] sm:$0xff]
    %v386 = vld [vmem:[%s360 + $0xc8] sm:$0xff]
    %v387 = vld [vmem:[%s360 + $0xd0] sm:$0xff]
    %v388 = vld [vmem:[%s360 + $0xd8] sm:$0xff]
    %v389 = vld [vmem:[%s360 + $0xe0] sm:$0xff]
    %v390 = vld [vmem:[%s360 + $0xe8] sm:$0xff]
    %v391 = vld [vmem:[%s360 + $0xf0] sm:$0xff]
    %v392 = vld [vmem:[%s360 + $0xf8] sm:$0xff]
    %v393 = vrot.slane %v124, 1
    %v394 = vsel %vm133, %v126, %v393
    %v395 = vrot.slane %v128, 7
    %v396 = vsel %vm136, %v395, %v394
    %v397 = vrot.slane %v130, 6
    %v398 = vsel %vm139, %v397, %v396
    %v399 = vrot.slane %v125, 1
    %v400 = vsel %vm133, %v127, %v399
    %v401 = vrot.slane %v129, 7
    %v402 = vsel %vm136, %v401, %v400
    %v403 = vrot.slane %v131, 6
    %v404 = vsel %vm139, %v403, %v402
    %v405 = vpack.c.b16 %v398, %v398
    %v406 = vpack.c.b16 %v404, %v404
    %v441 = vunpack.c.l.b16 %v361
    %v442 = vunpack.c.h.b16 %v361
    %v443 = vunpack.c.l.b16 %v362
    %v444 = vunpack.c.h.b16 %v362
    %v445 = vunpack.c.l.b16 %v363
    %v446 = vunpack.c.h.b16 %v363
    %v447 = vunpack.c.l.b16 %v364
    %v448 = vunpack.c.h.b16 %v364
    %v449 = vunpack.c.l.b16 %v365
    %v450 = vunpack.c.h.b16 %v365
    %v451 = vunpack.c.l.b16 %v366
    %v452 = vunpack.c.h.b16 %v366
    %v453 = vunpack.c.l.b16 %v367
    %v454 = vunpack.c.h.b16 %v367
    %v455 = vunpack.c.l.b16 %v368
    %v456 = vunpack.c.h.b16 %v368
    %v457 = vunpack.c.l.b16 %v369
    %v458 = vunpack.c.h.b16 %v369
    %v459 = vunpack.c.l.b16 %v370
    %v460 = vunpack.c.h.b16 %v370
    %v461 = vunpack.c.l.b16 %v371
    %v462 = vunpack.c.h.b16 %v371
    %v463 = vunpack.c.l.b16 %v372
    %v464 = vunpack.c.h.b16 %v372
    %v465 = vunpack.c.l.b16 %v373
    %v466 = vunpack.c.h.b16 %v373
    %v467 = vunpack.c.l.b16 %v374
    %v468 = vunpack.c.h.b16 %v374
    %v469 = vunpack.c.l.b16 %v375
    %v470 = vunpack.c.h.b16 %v375
    %v471 = vunpack.c.l.b16 %v376
    %v472 = vunpack.c.h.b16 %v376
    %v473 = vunpack.c.l.b16 %v377
    %v474 = vunpack.c.h.b16 %v377
    %v475 = vunpack.c.l.b16 %v378
    %v476 = vunpack.c.h.b16 %v378
    %v477 = vunpack.c.l.b16 %v379
    %v478 = vunpack.c.h.b16 %v379
    %v479 = vunpack.c.l.b16 %v380
    %v480 = vunpack.c.h.b16 %v380
    %v481 = vunpack.c.l.b16 %v381
    %v482 = vunpack.c.h.b16 %v381
    %v483 = vunpack.c.l.b16 %v382
    %v484 = vunpack.c.h.b16 %v382
    %v485 = vunpack.c.l.b16 %v383
    %v486 = vunpack.c.h.b16 %v383
    %v487 = vunpack.c.l.b16 %v384
    %v488 = vunpack.c.h.b16 %v384
    %v489 = vunpack.c.l.b16 %v385
    %v490 = vunpack.c.h.b16 %v385
    %v491 = vunpack.c.l.b16 %v386
    %v492 = vunpack.c.h.b16 %v386
    %v493 = vunpack.c.l.b16 %v387
    %v494 = vunpack.c.h.b16 %v387
    %v495 = vunpack.c.l.b16 %v388
    %v496 = vunpack.c.h.b16 %v388
    %v497 = vunpack.c.l.b16 %v389
    %v498 = vunpack.c.h.b16 %v389
    %v499 = vunpack.c.l.b16 %v390
    %v500 = vunpack.c.h.b16 %v390
    %v501 = vunpack.c.l.b16 %v391
    %v502 = vunpack.c.h.b16 %v391
    %v503 = vunpack.c.l.b16 %v392
    %v504 = vunpack.c.h.b16 %v392
    %v505 = vpack.c.b16 %v443, %v441
    %v506 = vpack.c.b16 %v444, %v442
    %v507 = vpack.c.b16 %v447, %v445
    %v508 = vpack.c.b16 %v448, %v446
    %v509 = vpack.c.b16 %v451, %v449
    %v510 = vpack.c.b16 %v452, %v450
    %v511 = vpack.c.b16 %v455, %v453
    %v512 = vpack.c.b16 %v456, %v454
    %v513 = vpack.c.b16 %v459, %v457
    %v514 = vpack.c.b16 %v460, %v458
    %v515 = vpack.c.b16 %v463, %v461
    %v516 = vpack.c.b16 %v464, %v462
    %v517 = vpack.c.b16 %v467, %v465
    %v518 = vpack.c.b16 %v468, %v466
    %v519 = vpack.c.b16 %v471, %v469
    %v520 = vpack.c.b16 %v472, %v470
    %v521 = vpack.c.b16 %v475, %v473
    %v522 = vpack.c.b16 %v476, %v474
    %v523 = vpack.c.b16 %v479, %v477
    %v524 = vpack.c.b16 %v480, %v478
    %v525 = vpack.c.b16 %v483, %v481
    %v526 = vpack.c.b16 %v484, %v482
    %v527 = vpack.c.b16 %v487, %v485
    %v528 = vpack.c.b16 %v488, %v486
    %v529 = vpack.c.b16 %v491, %v489
    %v530 = vpack.c.b16 %v492, %v490
    %v531 = vpack.c.b16 %v495, %v493
    %v532 = vpack.c.b16 %v496, %v494
    %v533 = vpack.c.b16 %v499, %v497
    %v534 = vpack.c.b16 %v500, %v498
    %v535 = vpack.c.b16 %v503, %v501
    %v536 = vpack.c.b16 %v504, %v502
    %569 = vmatprep.subr.bf16.mxu0 %v506
    %570 = vmatpush1.bf16.msra.mxu0 %v505
    %571 = vmatprep.subr.bf16.mxu0 %v508
    %572 = vmatpush1.bf16.msra.mxu0 %v507
    %573 = vmatprep.subr.bf16.mxu0 %v510
    %574 = vmatpush1.bf16.msra.mxu0 %v509
    %575 = vmatprep.subr.bf16.mxu0 %v512
    %576 = vmatpush1.bf16.msra.mxu0 %v511
    %577 = vmatprep.subr.bf16.mxu0 %v514
    %578 = vmatpush1.bf16.msra.mxu0 %v513
    %579 = vmatprep.subr.bf16.mxu0 %v516
    %580 = vmatpush1.bf16.msra.mxu0 %v515
    %581 = vmatprep.subr.bf16.mxu0 %v518
    %582 = vmatpush1.bf16.msra.mxu0 %v517
    %583 = vmatprep.subr.bf16.mxu0 %v520
    %584 = vmatpush1.bf16.msra.mxu0 %v519
    %585 = vmatprep.subr.bf16.mxu0 %v522
    %586 = vmatpush1.bf16.msra.mxu0 %v521
    %587 = vmatprep.subr.bf16.mxu0 %v524
    %588 = vmatpush1.bf16.msra.mxu0 %v523
    %589 = vmatprep.subr.bf16.mxu0 %v526
    %590 = vmatpush1.bf16.msra.mxu0 %v525
    %591 = vmatprep.subr.bf16.mxu0 %v528
    %592 = vmatpush1.bf16.msra.mxu0 %v527
    %593 = vmatprep.subr.bf16.mxu0 %v530
    %594 = vmatpush1.bf16.msra.mxu0 %v529
    %595 = vmatprep.subr.bf16.mxu0 %v532
    %596 = vmatpush1.bf16.msra.mxu0 %v531
    %597 = vmatprep.subr.bf16.mxu0 %v534
    %598 = vmatpush1.bf16.msra.mxu0 %v533
    %599 = vmatprep.subr.bf16.mxu0 %v536
    %600 = vmatpush1.bf16.msra.mxu0 %v535
    %601 = vmatprep.mubr.bf16.mxu0 %v406
    %602 = vmatmul.mubr.bf16.gmra.mrb[0].mxu0 %v405
    %v603 = vpop.f32.mrb[0].mxu0
    %v604 = vadd.f32 0.0, %v603
    %v605 = vpop.f32.mrb[0].mxu0
    %v606 = vadd.f32 0.0, %v605
    %v607 = vpop.f32.mrb[0].mxu0
    %v608 = vpop.f32.mrb[0].mxu0
    %609 = vdwg.mxu0
    %v612 = vrot.slane %v604, 2
    %v613 = vrot.slane %v606, 2
    %v616 = vadd.f32 %v604, %v612
    %v617 = vadd.f32 %v606, %v613
    %s618 = scalar_lea.vmem [#allocation2], 512
    %v619 = vld [vmem:[%s618] sm:$0xff]
    %v620 = vld [vmem:[%s618 + $0x8] sm:$0xff]
    %v621 = vld [vmem:[%s618 + $0x10] sm:$0xff]
    %v622 = vld [vmem:[%s618 + $0x18] sm:$0xff]
    %v623 = vld [vmem:[%s618 + $0x20] sm:$0xff]
    %v624 = vld [vmem:[%s618 + $0x28] sm:$0xff]
    %v625 = vld [vmem:[%s618 + $0x30] sm:$0xff]
    %v626 = vld [vmem:[%s618 + $0x38] sm:$0xff]
    %v627 = vld [vmem:[%s618 + $0x40] sm:$0xff]
    %v628 = vld [vmem:[%s618 + $0x48] sm:$0xff]
    %v629 = vld [vmem:[%s618 + $0x50] sm:$0xff]
    %v630 = vld [vmem:[%s618 + $0x58] sm:$0xff]
    %v631 = vld [vmem:[%s618 + $0x60] sm:$0xff]
    %v632 = vld [vmem:[%s618 + $0x68] sm:$0xff]
    %v633 = vld [vmem:[%s618 + $0x70] sm:$0xff]
    %v634 = vld [vmem:[%s618 + $0x78] sm:$0xff]
    %v635 = vld [vmem:[%s618 + $0x80] sm:$0xff]
    %v636 = vld [vmem:[%s618 + $0x88] sm:$0xff]
    %v637 = vld [vmem:[%s618 + $0x90] sm:$0xff]
    %v638 = vld [vmem:[%s618 + $0x98] sm:$0xff]
    %v639 = vld [vmem:[%s618 + $0xa0] sm:$0xff]
    %v640 = vld [vmem:[%s618 + $0xa8] sm:$0xff]
    %v641 = vld [vmem:[%s618 + $0xb0] sm:$0xff]
    %v642 = vld [vmem:[%s618 + $0xb8] sm:$0xff]
    %v643 = vld [vmem:[%s618 + $0xc0] sm:$0xff]
    %v644 = vld [vmem:[%s618 + $0xc8] sm:$0xff]
    %v645 = vld [vmem:[%s618 + $0xd0] sm:$0xff]
    %v646 = vld [vmem:[%s618 + $0xd8] sm:$0xff]
    %v647 = vld [vmem:[%s618 + $0xe0] sm:$0xff]
    %v648 = vld [vmem:[%s618 + $0xe8] sm:$0xff]
    %v649 = vld [vmem:[%s618 + $0xf0] sm:$0xff]
    %v650 = vld [vmem:[%s618 + $0xf8] sm:$0xff]
    %v651 = vrot.slane %v124, 2
    %v652 = vrot.slane %v126, 1
    %v653 = vsel %vm133, %v652, %v651
    %v654 = vsel %vm136, %v128, %v653
    %v655 = vrot.slane %v130, 7
    %v656 = vsel %vm139, %v655, %v654
    %v657 = vrot.slane %v125, 2
    %v658 = vrot.slane %v127, 1
    %v659 = vsel %vm133, %v658, %v657
    %v660 = vsel %vm136, %v129, %v659
    %v661 = vrot.slane %v131, 7
    %v662 = vsel %vm139, %v661, %v660
    %v663 = vpack.c.b16 %v656, %v656
    %v664 = vpack.c.b16 %v662, %v662
    %v699 = vunpack.c.l.b16 %v619
    %v700 = vunpack.c.h.b16 %v619
    %v701 = vunpack.c.l.b16 %v620
    %v702 = vunpack.c.h.b16 %v620
    %v703 = vunpack.c.l.b16 %v621
    %v704 = vunpack.c.h.b16 %v621
    %v705 = vunpack.c.l.b16 %v622
    %v706 = vunpack.c.h.b16 %v622
    %v707 = vunpack.c.l.b16 %v623
    %v708 = vunpack.c.h.b16 %v623
    %v709 = vunpack.c.l.b16 %v624
    %v710 = vunpack.c.h.b16 %v624
    %v711 = vunpack.c.l.b16 %v625
    %v712 = vunpack.c.h.b16 %v625
    %v713 = vunpack.c.l.b16 %v626
    %v714 = vunpack.c.h.b16 %v626
    %v715 = vunpack.c.l.b16 %v627
    %v716 = vunpack.c.h.b16 %v627
    %v717 = vunpack.c.l.b16 %v628
    %v718 = vunpack.c.h.b16 %v628
    %v719 = vunpack.c.l.b16 %v629
    %v720 = vunpack.c.h.b16 %v629
    %v721 = vunpack.c.l.b16 %v630
    %v722 = vunpack.c.h.b16 %v630
    %v723 = vunpack.c.l.b16 %v631
    %v724 = vunpack.c.h.b16 %v631
    %v725 = vunpack.c.l.b16 %v632
    %v726 = vunpack.c.h.b16 %v632
    %v727 = vunpack.c.l.b16 %v633
    %v728 = vunpack.c.h.b16 %v633
    %v729 = vunpack.c.l.b16 %v634
    %v730 = vunpack.c.h.b16 %v634
    %v731 = vunpack.c.l.b16 %v635
    %v732 = vunpack.c.h.b16 %v635
    %v733 = vunpack.c.l.b16 %v636
    %v734 = vunpack.c.h.b16 %v636
    %v735 = vunpack.c.l.b16 %v637
    %v736 = vunpack.c.h.b16 %v637
    %v737 = vunpack.c.l.b16 %v638
    %v738 = vunpack.c.h.b16 %v638
    %v739 = vunpack.c.l.b16 %v639
    %v740 = vunpack.c.h.b16 %v639
    %v741 = vunpack.c.l.b16 %v640
    %v742 = vunpack.c.h.b16 %v640
    %v743 = vunpack.c.l.b16 %v641
    %v744 = vunpack.c.h.b16 %v641
    %v745 = vunpack.c.l.b16 %v642
    %v746 = vunpack.c.h.b16 %v642
    %v747 = vunpack.c.l.b16 %v643
    %v748 = vunpack.c.h.b16 %v643
    %v749 = vunpack.c.l.b16 %v644
    %v750 = vunpack.c.h.b16 %v644
    %v751 = vunpack.c.l.b16 %v645
    %v752 = vunpack.c.h.b16 %v645
    %v753 = vunpack.c.l.b16 %v646
    %v754 = vunpack.c.h.b16 %v646
    %v755 = vunpack.c.l.b16 %v647
    %v756 = vunpack.c.h.b16 %v647
    %v757 = vunpack.c.l.b16 %v648
    %v758 = vunpack.c.h.b16 %v648
    %v759 = vunpack.c.l.b16 %v649
    %v760 = vunpack.c.h.b16 %v649
    %v761 = vunpack.c.l.b16 %v650
    %v762 = vunpack.c.h.b16 %v650
    %v763 = vpack.c.b16 %v701, %v699
    %v764 = vpack.c.b16 %v702, %v700
    %v765 = vpack.c.b16 %v705, %v703
    %v766 = vpack.c.b16 %v706, %v704
    %v767 = vpack.c.b16 %v709, %v707
    %v768 = vpack.c.b16 %v710, %v708
    %v769 = vpack.c.b16 %v713, %v711
    %v770 = vpack.c.b16 %v714, %v712
    %v771 = vpack.c.b16 %v717, %v715
    %v772 = vpack.c.b16 %v718, %v716
    %v773 = vpack.c.b16 %v721, %v719
    %v774 = vpack.c.b16 %v722, %v720
    %v775 = vpack.c.b16 %v725, %v723
    %v776 = vpack.c.b16 %v726, %v724
    %v777 = vpack.c.b16 %v729, %v727
    %v778 = vpack.c.b16 %v730, %v728
    %v779 = vpack.c.b16 %v733, %v731
    %v780 = vpack.c.b16 %v734, %v732
    %v781 = vpack.c.b16 %v737, %v735
    %v782 = vpack.c.b16 %v738, %v736
    %v783 = vpack.c.b16 %v741, %v739
    %v784 = vpack.c.b16 %v742, %v740
    %v785 = vpack.c.b16 %v745, %v743
    %v786 = vpack.c.b16 %v746, %v744
    %v787 = vpack.c.b16 %v749, %v747
    %v788 = vpack.c.b16 %v750, %v748
    %v789 = vpack.c.b16 %v753, %v751
    %v790 = vpack.c.b16 %v754, %v752
    %v791 = vpack.c.b16 %v757, %v755
    %v792 = vpack.c.b16 %v758, %v756
    %v793 = vpack.c.b16 %v761, %v759
    %v794 = vpack.c.b16 %v762, %v760
    %827 = vmatprep.subr.bf16.mxu0 %v764
    %828 = vmatpush1.bf16.msra.mxu0 %v763
    %829 = vmatprep.subr.bf16.mxu0 %v766
    %830 = vmatpush1.bf16.msra.mxu0 %v765
    %831 = vmatprep.subr.bf16.mxu0 %v768
    %832 = vmatpush1.bf16.msra.mxu0 %v767
    %833 = vmatprep.subr.bf16.mxu0 %v770
    %834 = vmatpush1.bf16.msra.mxu0 %v769
    %835 = vmatprep.subr.bf16.mxu0 %v772
    %836 = vmatpush1.bf16.msra.mxu0 %v771
    %837 = vmatprep.subr.bf16.mxu0 %v774
    %838 = vmatpush1.bf16.msra.mxu0 %v773
    %839 = vmatprep.subr.bf16.mxu0 %v776
    %840 = vmatpush1.bf16.msra.mxu0 %v775
    %841 = vmatprep.subr.bf16.mxu0 %v778
    %842 = vmatpush1.bf16.msra.mxu0 %v777
    %843 = vmatprep.subr.bf16.mxu0 %v780
    %844 = vmatpush1.bf16.msra.mxu0 %v779
    %845 = vmatprep.subr.bf16.mxu0 %v782
    %846 = vmatpush1.bf16.msra.mxu0 %v781
    %847 = vmatprep.subr.bf16.mxu0 %v784
    %848 = vmatpush1.bf16.msra.mxu0 %v783
    %849 = vmatprep.subr.bf16.mxu0 %v786
    %850 = vmatpush1.bf16.msra.mxu0 %v785
    %851 = vmatprep.subr.bf16.mxu0 %v788
    %852 = vmatpush1.bf16.msra.mxu0 %v787
    %853 = vmatprep.subr.bf16.mxu0 %v790
    %854 = vmatpush1.bf16.msra.mxu0 %v789
    %855 = vmatprep.subr.bf16.mxu0 %v792
    %856 = vmatpush1.bf16.msra.mxu0 %v791
    %857 = vmatprep.subr.bf16.mxu0 %v794
    %858 = vmatpush1.bf16.msra.mxu0 %v793
    %859 = vmatprep.mubr.bf16.mxu0 %v664
    %860 = vmatmul.mubr.bf16.gmra.mrb[0].mxu0 %v663
    %v861 = vpop.f32.mrb[0].mxu0
    %v862 = vadd.f32 0.0, %v861
    %v863 = vpop.f32.mrb[0].mxu0
    %v864 = vadd.f32 0.0, %v863
    %v865 = vpop.f32.mrb[0].mxu0
    %v866 = vpop.f32.mrb[0].mxu0
    %867 = vdwg.mxu0
    %v870 = vrot.slane %v862, 2
    %v871 = vrot.slane %v864, 2
    %v874 = vadd.f32 %v862, %v870
    %v875 = vadd.f32 %v864, %v871
    %s876 = scalar_lea.vmem [#allocation2], 768
    %v877 = vld [vmem:[%s876] sm:$0xff]
    %v878 = vld [vmem:[%s876 + $0x8] sm:$0xff]
    %v879 = vld [vmem:[%s876 + $0x10] sm:$0xff]
    %v880 = vld [vmem:[%s876 + $0x18] sm:$0xff]
    %v881 = vld [vmem:[%s876 + $0x20] sm:$0xff]
    %v882 = vld [vmem:[%s876 + $0x28] sm:$0xff]
    %v883 = vld [vmem:[%s876 + $0x30] sm:$0xff]
    %v884 = vld [vmem:[%s876 + $0x38] sm:$0xff]
    %v885 = vld [vmem:[%s876 + $0x40] sm:$0xff]
    %v886 = vld [vmem:[%s876 + $0x48] sm:$0xff]
    %v887 = vld [vmem:[%s876 + $0x50] sm:$0xff]
    %v888 = vld [vmem:[%s876 + $0x58] sm:$0xff]
    %v889 = vld [vmem:[%s876 + $0x60] sm:$0xff]
    %v890 = vld [vmem:[%s876 + $0x68] sm:$0xff]
    %v891 = vld [vmem:[%s876 + $0x70] sm:$0xff]
    %v892 = vld [vmem:[%s876 + $0x78] sm:$0xff]
    %v893 = vld [vmem:[%s876 + $0x80] sm:$0xff]
    %v894 = vld [vmem:[%s876 + $0x88] sm:$0xff]
    %v895 = vld [vmem:[%s876 + $0x90] sm:$0xff]
    %v896 = vld [vmem:[%s876 + $0x98] sm:$0xff]
    %v897 = vld [vmem:[%s876 + $0xa0] sm:$0xff]
    %v898 = vld [vmem:[%s876 + $0xa8] sm:$0xff]
    %v899 = vld [vmem:[%s876 + $0xb0] sm:$0xff]
    %v900 = vld [vmem:[%s876 + $0xb8] sm:$0xff]
    %v901 = vld [vmem:[%s876 + $0xc0] sm:$0xff]
    %v902 = vld [vmem:[%s876 + $0xc8] sm:$0xff]
    %v903 = vld [vmem:[%s876 + $0xd0] sm:$0xff]
    %v904 = vld [vmem:[%s876 + $0xd8] sm:$0xff]
    %v905 = vld [vmem:[%s876 + $0xe0] sm:$0xff]
    %v906 = vld [vmem:[%s876 + $0xe8] sm:$0xff]
    %v907 = vld [vmem:[%s876 + $0xf0] sm:$0xff]
    %v908 = vld [vmem:[%s876 + $0xf8] sm:$0xff]
    %v909 = vrot.slane %v124, 3
    %v910 = vrot.slane %v126, 2
    %v911 = vsel %vm133, %v910, %v909
    %v912 = vrot.slane %v128, 1
    %v913 = vsel %vm136, %v912, %v911
    %v914 = vsel %vm139, %v130, %v913
    %v915 = vrot.slane %v125, 3
    %v916 = vrot.slane %v127, 2
    %v917 = vsel %vm133, %v916, %v915
    %v918 = vrot.slane %v129, 1
    %v919 = vsel %vm136, %v918, %v917
    %v920 = vsel %vm139, %v131, %v919
    %v921 = vpack.c.b16 %v914, %v914
    %v922 = vpack.c.b16 %v920, %v920
    %v957 = vunpack.c.l.b16 %v877
    %v958 = vunpack.c.h.b16 %v877
    %v959 = vunpack.c.l.b16 %v878
    %v960 = vunpack.c.h.b16 %v878
    %v961 = vunpack.c.l.b16 %v879
    %v962 = vunpack.c.h.b16 %v879
    %v963 = vunpack.c.l.b16 %v880
    %v964 = vunpack.c.h.b16 %v880
    %v965 = vunpack.c.l.b16 %v881
    %v966 = vunpack.c.h.b16 %v881
    %v967 = vunpack.c.l.b16 %v882
    %v968 = vunpack.c.h.b16 %v882
    %v969 = vunpack.c.l.b16 %v883
    %v970 = vunpack.c.h.b16 %v883
    %v971 = vunpack.c.l.b16 %v884
    %v972 = vunpack.c.h.b16 %v884
    %v973 = vunpack.c.l.b16 %v885
    %v974 = vunpack.c.h.b16 %v885
    %v975 = vunpack.c.l.b16 %v886
    %v976 = vunpack.c.h.b16 %v886
    %v977 = vunpack.c.l.b16 %v887
    %v978 = vunpack.c.h.b16 %v887
    %v979 = vunpack.c.l.b16 %v888
    %v980 = vunpack.c.h.b16 %v888
    %v981 = vunpack.c.l.b16 %v889
    %v982 = vunpack.c.h.b16 %v889
    %v983 = vunpack.c.l.b16 %v890
    %v984 = vunpack.c.h.b16 %v890
    %v985 = vunpack.c.l.b16 %v891
    %v986 = vunpack.c.h.b16 %v891
    %v987 = vunpack.c.l.b16 %v892
    %v988 = vunpack.c.h.b16 %v892
    %v989 = vunpack.c.l.b16 %v893
    %v990 = vunpack.c.h.b16 %v893
    %v991 = vunpack.c.l.b16 %v894
    %v992 = vunpack.c.h.b16 %v894
    %v993 = vunpack.c.l.b16 %v895
    %v994 = vunpack.c.h.b16 %v895
    %v995 = vunpack.c.l.b16 %v896
    %v996 = vunpack.c.h.b16 %v896
    %v997 = vunpack.c.l.b16 %v897
    %v998 = vunpack.c.h.b16 %v897
    %v999 = vunpack.c.l.b16 %v898
    %v1000 = vunpack.c.h.b16 %v898
    %v1001 = vunpack.c.l.b16 %v899
    %v1002 = vunpack.c.h.b16 %v899
    %v1003 = vunpack.c.l.b16 %v900
    %v1004 = vunpack.c.h.b16 %v900
    %v1005 = vunpack.c.l.b16 %v901
    %v1006 = vunpack.c.h.b16 %v901
    %v1007 = vunpack.c.l.b16 %v902
    %v1008 = vunpack.c.h.b16 %v902
    %v1009 = vunpack.c.l.b16 %v903
    %v1010 = vunpack.c.h.b16 %v903
    %v1011 = vunpack.c.l.b16 %v904
    %v1012 = vunpack.c.h.b16 %v904
    %v1013 = vunpack.c.l.b16 %v905
    %v1014 = vunpack.c.h.b16 %v905
    %v1015 = vunpack.c.l.b16 %v906
    %v1016 = vunpack.c.h.b16 %v906
    %v1017 = vunpack.c.l.b16 %v907
    %v1018 = vunpack.c.h.b16 %v907
    %v1019 = vunpack.c.l.b16 %v908
    %v1020 = vunpack.c.h.b16 %v908
    %v1021 = vpack.c.b16 %v959, %v957
    %v1022 = vpack.c.b16 %v960, %v958
    %v1023 = vpack.c.b16 %v963, %v961
    %v1024 = vpack.c.b16 %v964, %v962
    %v1025 = vpack.c.b16 %v967, %v965
    %v1026 = vpack.c.b16 %v968, %v966
    %v1027 = vpack.c.b16 %v971, %v969
    %v1028 = vpack.c.b16 %v972, %v970
    %v1029 = vpack.c.b16 %v975, %v973
    %v1030 = vpack.c.b16 %v976, %v974
    %v1031 = vpack.c.b16 %v979, %v977
    %v1032 = vpack.c.b16 %v980, %v978
    %v1033 = vpack.c.b16 %v983, %v981
    %v1034 = vpack.c.b16 %v984, %v982
    %v1035 = vpack.c.b16 %v987, %v985
    %v1036 = vpack.c.b16 %v988, %v986
    %v1037 = vpack.c.b16 %v991, %v989
    %v1038 = vpack.c.b16 %v992, %v990
    %v1039 = vpack.c.b16 %v995, %v993
    %v1040 = vpack.c.b16 %v996, %v994
    %v1041 = vpack.c.b16 %v999, %v997
    %v1042 = vpack.c.b16 %v1000, %v998
    %v1043 = vpack.c.b16 %v1003, %v1001
    %v1044 = vpack.c.b16 %v1004, %v1002
    %v1045 = vpack.c.b16 %v1007, %v1005
    %v1046 = vpack.c.b16 %v1008, %v1006
    %v1047 = vpack.c.b16 %v1011, %v1009
    %v1048 = vpack.c.b16 %v1012, %v1010
    %v1049 = vpack.c.b16 %v1015, %v1013
    %v1050 = vpack.c.b16 %v1016, %v1014
    %v1051 = vpack.c.b16 %v1019, %v1017
    %v1052 = vpack.c.b16 %v1020, %v1018
    %1085 = vmatprep.subr.bf16.mxu0 %v1022
    %1086 = vmatpush1.bf16.msra.mxu0 %v1021
    %1087 = vmatprep.subr.bf16.mxu0 %v1024
    %1088 = vmatpush1.bf16.msra.mxu0 %v1023
    %1089 = vmatprep.subr.bf16.mxu0 %v1026
    %1090 = vmatpush1.bf16.msra.mxu0 %v1025
    %1091 = vmatprep.subr.bf16.mxu0 %v1028
    %1092 = vmatpush1.bf16.msra.mxu0 %v1027
    %1093 = vmatprep.subr.bf16.mxu0 %v1030
    %1094 = vmatpush1.bf16.msra.mxu0 %v1029
    %1095 = vmatprep.subr.bf16.mxu0 %v1032
    %1096 = vmatpush1.bf16.msra.mxu0 %v1031
    %1097 = vmatprep.subr.bf16.mxu0 %v1034
    %1098 = vmatpush1.bf16.msra.mxu0 %v1033
    %1099 = vmatprep.subr.bf16.mxu0 %v1036
    %1100 = vmatpush1.bf16.msra.mxu0 %v1035
    %1101 = vmatprep.subr.bf16.mxu0 %v1038
    %1102 = vmatpush1.bf16.msra.mxu0 %v1037
    %1103 = vmatprep.subr.bf16.mxu0 %v1040
    %1104 = vmatpush1.bf16.msra.mxu0 %v1039
    %1105 = vmatprep.subr.bf16.mxu0 %v1042
    %1106 = vmatpush1.bf16.msra.mxu0 %v1041
    %1107 = vmatprep.subr.bf16.mxu0 %v1044
    %1108 = vmatpush1.bf16.msra.mxu0 %v1043
    %1109 = vmatprep.subr.bf16.mxu0 %v1046
    %1110 = vmatpush1.bf16.msra.mxu0 %v1045
    %1111 = vmatprep.subr.bf16.mxu0 %v1048
    %1112 = vmatpush1.bf16.msra.mxu0 %v1047
    %1113 = vmatprep.subr.bf16.mxu0 %v1050
    %1114 = vmatpush1.bf16.msra.mxu0 %v1049
    %1115 = vmatprep.subr.bf16.mxu0 %v1052
    %1116 = vmatpush1.bf16.msra.mxu0 %v1051
    %1117 = vmatprep.mubr.bf16.mxu0 %v922
    %1118 = vmatmul.mubr.bf16.gmra.mrb[0].mxu0 %v921
    %v1119 = vpop.f32.mrb[0].mxu0
    %v1120 = vadd.f32 0.0, %v1119
    %v1121 = vpop.f32.mrb[0].mxu0
    %v1122 = vadd.f32 0.0, %v1121
    %v1123 = vpop.f32.mrb[0].mxu0
    %v1124 = vpop.f32.mrb[0].mxu0
    %1125 = vdwg.mxu0
    %v1128 = vrot.slane %v1120, 2
    %v1129 = vrot.slane %v1122, 2
    %v1132 = vadd.f32 %v1120, %v1128
    %v1133 = vadd.f32 %v1122, %v1129
    %v1136 = vrot.slane %v616, 6
    %v1137 = vrot.slane %v617, 6
    %v1142 = vrot.slane %v874, 4
    %v1143 = vrot.slane %v875, 4
    %v1148 = vrot.slane %v1132, 2
    %v1149 = vrot.slane %v1133, 2
    %vm1152 = vcmask 1041408
    %v1153 = vsel %vm1152, %v358, %v1136
    %v1154 = vsel %vm1152, %v359, %v1137
    %vm1155 = vcmask 1043456
    %v1156 = vsel %vm1155, %v1153, %v1142
    %v1157 = vsel %vm1155, %v1154, %v1143
    %vm1158 = vcmask 1045504
    %v1159 = vsel %vm1158, %v1156, %v1148
    %v1160 = vsel %vm1158, %v1157, %v1149
    %1161 = vrot.lane.b32.xlu0 %v1159, 17
    %v1162 = vpop.permute.xlu0 %1161
    %1163 = vrot.lane.b32.xlu0 %v1160, 17
    %v1164 = vpop.permute.xlu0 %1163
    %v1165 = vlaneseq
    %v1166 = vand.u32 %v1165, 127
    %vm1167 = vcmp.lt.s32.totalorder %v1166, 17
    %v1168 = vsel %vm1167, %v1162, %v1164
    %v1169 = vsel %vm1167, %v1164, %v1162
    %v1170 = vld [vmem:[#allocation4] sm:$0xff]
    %v1171 = vld [vmem:[#allocation4 + $0x8] sm:$0xff]
    %v1172 = vlaneseq
    %v1173 = vshrl.u32 %v1172, 7
    %v1174 = vsub.s32 0, %v1173
    %v1175 = vrot.slane %v1169, %v1174
    %v1176 = vlaneseq
    %v1177 = vshrl.u32 %v1176, 7
    %v1178 = vsub.s32 0, %v1177
    %v1179 = vrot.slane %v1168, %v1178
    %v1180 = vmul.f32 %v1170, %v1175
    %v1181 = vmul.f32 %v1171, %v1179
    %v1182 = vadd.f32 %v1180, 0.0
    %v1183 = vadd.f32 %v1181, 0.0
    %v1184 = vlaneseq
    %v1185 = vshrl.u32 %v1184, 7
    %v1186 = vsub.s32 1, %v1185
    %v1187 = vrot.slane %v1169, %v1186
    %v1188 = vlaneseq
    %v1189 = vshrl.u32 %v1188, 7
    %v1190 = vsub.s32 1, %v1189
    %v1191 = vrot.slane %v1168, %v1190
    %v1192 = vmul.f32 %v1170, %v1187
    %v1193 = vmul.f32 %v1171, %v1191
    %v1194 = vadd.f32 %v1192, 0.0
    %v1195 = vadd.f32 %v1193, 0.0
    %s1196 = scalar_lea.vmem [#allocation4], 16
    %v1197 = vld [vmem:[%s1196] sm:$0xff]
    %v1198 = vld [vmem:[%s1196 + $0x8] sm:$0xff]
    %v1199 = vlaneseq
    %v1200 = vshrl.u32 %v1199, 7
    %v1201 = vsub.s32 2, %v1200
    %v1202 = vrot.slane %v1169, %v1201
    %v1203 = vlaneseq
    %v1204 = vshrl.u32 %v1203, 7
    %v1205 = vsub.s32 2, %v1204
    %v1206 = vrot.slane %v1168, %v1205
    %v1207 = vmul.f32 %v1197, %v1202
    %v1208 = vmul.f32 %v1198, %v1206
    %v1209 = vadd.f32 %v1182, %v1207
    %v1210 = vadd.f32 %v1183, %v1208
    %v1211 = vlaneseq
    %v1212 = vshrl.u32 %v1211, 7
    %v1213 = vsub.s32 3, %v1212
    %v1214 = vrot.slane %v1169, %v1213
    %v1215 = vlaneseq
    %v1216 = vshrl.u32 %v1215, 7
    %v1217 = vsub.s32 3, %v1216
    %v1218 = vrot.slane %v1168, %v1217
    %v1219 = vmul.f32 %v1197, %v1214
    %v1220 = vmul.f32 %v1198, %v1218
    %v1221 = vadd.f32 %v1194, %v1219
    %v1222 = vadd.f32 %v1195, %v1220
    %s1223 = scalar_lea.vmem [#allocation4], 32
    %v1224 = vld [vmem:[%s1223] sm:$0xff]
    %v1225 = vld [vmem:[%s1223 + $0x8] sm:$0xff]
    %v1226 = vlaneseq
    %v1227 = vshrl.u32 %v1226, 7
    %v1228 = vsub.s32 4, %v1227
    %v1229 = vrot.slane %v1169, %v1228
    %v1230 = vlaneseq
    %v1231 = vshrl.u32 %v1230, 7
    %v1232 = vsub.s32 4, %v1231
    %v1233 = vrot.slane %v1168, %v1232
    %v1234 = vmul.f32 %v1224, %v1229
    %v1235 = vmul.f32 %v1225, %v1233
    %v1236 = vadd.f32 %v1209, %v1234
    %v1237 = vadd.f32 %v1210, %v1235
    %v1238 = vlaneseq
    %v1239 = vshrl.u32 %v1238, 7
    %v1240 = vsub.s32 5, %v1239
    %v1241 = vrot.slane %v1169, %v1240
    %v1242 = vlaneseq
    %v1243 = vshrl.u32 %v1242, 7
    %v1244 = vsub.s32 5, %v1243
    %v1245 = vrot.slane %v1168, %v1244
    %v1246 = vmul.f32 %v1224, %v1241
    %v1247 = vmul.f32 %v1225, %v1245
    %v1248 = vadd.f32 %v1221, %v1246
    %v1249 = vadd.f32 %v1222, %v1247
    %s1250 = scalar_lea.vmem [#allocation4], 48
    %v1251 = vld [vmem:[%s1250] sm:$0xff]
    %v1252 = vld [vmem:[%s1250 + $0x8] sm:$0xff]
    %v1253 = vlaneseq
    %v1254 = vshrl.u32 %v1253, 7
    %v1255 = vsub.s32 6, %v1254
    %v1256 = vrot.slane %v1169, %v1255
    %v1257 = vlaneseq
    %v1258 = vshrl.u32 %v1257, 7
    %v1259 = vsub.s32 6, %v1258
    %v1260 = vrot.slane %v1168, %v1259
    %v1261 = vmul.f32 %v1251, %v1256
    %v1262 = vmul.f32 %v1252, %v1260
    %v1263 = vadd.f32 %v1236, %v1261
    %v1264 = vadd.f32 %v1237, %v1262
    %v1265 = vlaneseq
    %v1266 = vshrl.u32 %v1265, 7
    %v1267 = vsub.s32 7, %v1266
    %v1268 = vrot.slane %v1169, %v1267
    %v1269 = vlaneseq
    %v1270 = vshrl.u32 %v1269, 7
    %v1271 = vsub.s32 7, %v1270
    %v1272 = vrot.slane %v1168, %v1271
    %v1273 = vmul.f32 %v1251, %v1268
    %v1274 = vmul.f32 %v1252, %v1272
    %v1275 = vadd.f32 %v1248, %v1273
    %v1276 = vadd.f32 %v1249, %v1274
    %1277 = vrot.lane.b32.xlu0 %v1159, 16
    %v1278 = vpop.permute.xlu0 %1277
    %1279 = vrot.lane.b32.xlu0 %v1160, 16
    %v1280 = vpop.permute.xlu0 %1279
    %vm1281 = vcmp.lt.s32.totalorder %v1166, 16
    %v1282 = vsel %vm1281, %v1278, %v1280
    %v1283 = vsel %vm1281, %v1280, %v1278
    %s1284 = scalar_lea.vmem [#allocation4], 64
    %v1285 = vld [vmem:[%s1284] sm:$0xff]
    %v1286 = vld [vmem:[%s1284 + $0x8] sm:$0xff]
    %v1287 = vlaneseq
    %v1288 = vshrl.u32 %v1287, 7
    %v1289 = vsub.s32 0, %v1288
    %v1290 = vrot.slane %v1283, %v1289
    %v1291 = vlaneseq
    %v1292 = vshrl.u32 %v1291, 7
    %v1293 = vsub.s32 0, %v1292
    %v1294 = vrot.slane %v1282, %v1293
    %v1295 = vmul.f32 %v1285, %v1290
    %v1296 = vmul.f32 %v1286, %v1294
    %v1297 = vadd.f32 %v1263, %v1295
    %v1298 = vadd.f32 %v1264, %v1296
    %v1299 = vlaneseq
    %v1300 = vshrl.u32 %v1299, 7
    %v1301 = vsub.s32 1, %v1300
    %v1302 = vrot.slane %v1283, %v1301
    %v1303 = vlaneseq
    %v1304 = vshrl.u32 %v1303, 7
    %v1305 = vsub.s32 1, %v1304
    %v1306 = vrot.slane %v1282, %v1305
    %v1307 = vmul.f32 %v1285, %v1302
    %v1308 = vmul.f32 %v1286, %v1306
    %v1309 = vadd.f32 %v1275, %v1307
    %v1310 = vadd.f32 %v1276, %v1308
    %s1311 = scalar_lea.vmem [#allocation4], 80
    %v1312 = vld [vmem:[%s1311] sm:$0xff]
    %v1313 = vld [vmem:[%s1311 + $0x8] sm:$0xff]
    %v1314 = vlaneseq
    %v1315 = vshrl.u32 %v1314, 7
    %v1316 = vsub.s32 2, %v1315
    %v1317 = vrot.slane %v1283, %v1316
    %v1318 = vlaneseq
    %v1319 = vshrl.u32 %v1318, 7
    %v1320 = vsub.s32 2, %v1319
    %v1321 = vrot.slane %v1282, %v1320
    %v1322 = vmul.f32 %v1312, %v1317
    %v1323 = vmul.f32 %v1313, %v1321
    %v1324 = vadd.f32 %v1297, %v1322
    %v1325 = vadd.f32 %v1298, %v1323
    %v1326 = vlaneseq
    %v1327 = vshrl.u32 %v1326, 7
    %v1328 = vsub.s32 3, %v1327
    %v1329 = vrot.slane %v1283, %v1328
    %v1330 = vlaneseq
    %v1331 = vshrl.u32 %v1330, 7
    %v1332 = vsub.s32 3, %v1331
    %v1333 = vrot.slane %v1282, %v1332
    %v1334 = vmul.f32 %v1312, %v1329
    %v1335 = vmul.f32 %v1313, %v1333
    %v1336 = vadd.f32 %v1309, %v1334
    %v1337 = vadd.f32 %v1310, %v1335
    %s1338 = scalar_lea.vmem [#allocation4], 96
    %v1339 = vld [vmem:[%s1338] sm:$0xff]
    %v1340 = vld [vmem:[%s1338 + $0x8] sm:$0xff]
    %v1341 = vlaneseq
    %v1342 = vshrl.u32 %v1341, 7
    %v1343 = vsub.s32 4, %v1342
    %v1344 = vrot.slane %v1283, %v1343
    %v1345 = vlaneseq
    %v1346 = vshrl.u32 %v1345, 7
    %v1347 = vsub.s32 4, %v1346
    %v1348 = vrot.slane %v1282, %v1347
    %v1349 = vmul.f32 %v1339, %v1344
    %v1350 = vmul.f32 %v1340, %v1348
    %v1351 = vadd.f32 %v1324, %v1349
    %v1352 = vadd.f32 %v1325, %v1350
    %v1353 = vlaneseq
    %v1354 = vshrl.u32 %v1353, 7
    %v1355 = vsub.s32 5, %v1354
    %v1356 = vrot.slane %v1283, %v1355
    %v1357 = vlaneseq
    %v1358 = vshrl.u32 %v1357, 7
    %v1359 = vsub.s32 5, %v1358
    %v1360 = vrot.slane %v1282, %v1359
    %v1361 = vmul.f32 %v1339, %v1356
    %v1362 = vmul.f32 %v1340, %v1360
    %v1363 = vadd.f32 %v1336, %v1361
    %v1364 = vadd.f32 %v1337, %v1362
    %s1365 = scalar_lea.vmem [#allocation4], 112
    %v1366 = vld [vmem:[%s1365] sm:$0xff]
    %v1367 = vld [vmem:[%s1365 + $0x8] sm:$0xff]
    %v1368 = vlaneseq
    %v1369 = vshrl.u32 %v1368, 7
    %v1370 = vsub.s32 6, %v1369
    %v1371 = vrot.slane %v1283, %v1370
    %v1372 = vlaneseq
    %v1373 = vshrl.u32 %v1372, 7
    %v1374 = vsub.s32 6, %v1373
    %v1375 = vrot.slane %v1282, %v1374
    %v1376 = vmul.f32 %v1366, %v1371
    %v1377 = vmul.f32 %v1367, %v1375
    %v1378 = vadd.f32 %v1351, %v1376
    %v1379 = vadd.f32 %v1352, %v1377
    %v1380 = vlaneseq
    %v1381 = vshrl.u32 %v1380, 7
    %v1382 = vsub.s32 7, %v1381
    %v1383 = vrot.slane %v1283, %v1382
    %v1384 = vlaneseq
    %v1385 = vshrl.u32 %v1384, 7
    %v1386 = vsub.s32 7, %v1385
    %v1387 = vrot.slane %v1282, %v1386
    %v1388 = vmul.f32 %v1366, %v1383
    %v1389 = vmul.f32 %v1367, %v1387
    %v1390 = vadd.f32 %v1363, %v1388
    %v1391 = vadd.f32 %v1364, %v1389
    %1392 = vrot.lane.b32.xlu0 %v1159, 15
    %v1393 = vpop.permute.xlu0 %1392
    %1394 = vrot.lane.b32.xlu0 %v1160, 15
    %v1395 = vpop.permute.xlu0 %1394
    %vm1396 = vcmp.lt.s32.totalorder %v1166, 15
    %v1397 = vsel %vm1396, %v1393, %v1395
    %v1398 = vsel %vm1396, %v1395, %v1393
    %s1399 = scalar_lea.vmem [#allocation4], 128
    %v1400 = vld [vmem:[%s1399] sm:$0xff]
    %v1401 = vld [vmem:[%s1399 + $0x8] sm:$0xff]
    %v1402 = vlaneseq
    %v1403 = vshrl.u32 %v1402, 7
    %v1404 = vsub.s32 0, %v1403
    %v1405 = vrot.slane %v1398, %v1404
    %v1406 = vlaneseq
    %v1407 = vshrl.u32 %v1406, 7
    %v1408 = vsub.s32 0, %v1407
    %v1409 = vrot.slane %v1397, %v1408
    %v1410 = vmul.f32 %v1400, %v1405
    %v1411 = vmul.f32 %v1401, %v1409
    %v1412 = vadd.f32 %v1378, %v1410
    %v1413 = vadd.f32 %v1379, %v1411
    %v1414 = vlaneseq
    %v1415 = vshrl.u32 %v1414, 7
    %v1416 = vsub.s32 1, %v1415
    %v1417 = vrot.slane %v1398, %v1416
    %v1418 = vlaneseq
    %v1419 = vshrl.u32 %v1418, 7
    %v1420 = vsub.s32 1, %v1419
    %v1421 = vrot.slane %v1397, %v1420
    %v1422 = vmul.f32 %v1400, %v1417
    %v1423 = vmul.f32 %v1401, %v1421
    %v1424 = vadd.f32 %v1390, %v1422
    %v1425 = vadd.f32 %v1391, %v1423
    %s1426 = scalar_lea.vmem [#allocation4], 144
    %v1427 = vld [vmem:[%s1426] sm:$0xff]
    %v1428 = vld [vmem:[%s1426 + $0x8] sm:$0xff]
    %v1429 = vlaneseq
    %v1430 = vshrl.u32 %v1429, 7
    %v1431 = vsub.s32 2, %v1430
    %v1432 = vrot.slane %v1398, %v1431
    %v1433 = vlaneseq
    %v1434 = vshrl.u32 %v1433, 7
    %v1435 = vsub.s32 2, %v1434
    %v1436 = vrot.slane %v1397, %v1435
    %v1437 = vmul.f32 %v1427, %v1432
    %v1438 = vmul.f32 %v1428, %v1436
    %v1439 = vadd.f32 %v1412, %v1437
    %v1440 = vadd.f32 %v1413, %v1438
    %v1441 = vlaneseq
    %v1442 = vshrl.u32 %v1441, 7
    %v1443 = vsub.s32 3, %v1442
    %v1444 = vrot.slane %v1398, %v1443
    %v1445 = vlaneseq
    %v1446 = vshrl.u32 %v1445, 7
    %v1447 = vsub.s32 3, %v1446
    %v1448 = vrot.slane %v1397, %v1447
    %v1449 = vmul.f32 %v1427, %v1444
    %v1450 = vmul.f32 %v1428, %v1448
    %v1451 = vadd.f32 %v1424, %v1449
    %v1452 = vadd.f32 %v1425, %v1450
    %s1453 = scalar_lea.vmem [#allocation4], 160
    %v1454 = vld [vmem:[%s1453] sm:$0xff]
    %v1455 = vld [vmem:[%s1453 + $0x8] sm:$0xff]
    %v1456 = vlaneseq
    %v1457 = vshrl.u32 %v1456, 7
    %v1458 = vsub.s32 4, %v1457
    %v1459 = vrot.slane %v1398, %v1458
    %v1460 = vlaneseq
    %v1461 = vshrl.u32 %v1460, 7
    %v1462 = vsub.s32 4, %v1461
    %v1463 = vrot.slane %v1397, %v1462
    %v1464 = vmul.f32 %v1454, %v1459
    %v1465 = vmul.f32 %v1455, %v1463
    %v1466 = vadd.f32 %v1439, %v1464
    %v1467 = vadd.f32 %v1440, %v1465
    %v1468 = vlaneseq
    %v1469 = vshrl.u32 %v1468, 7
    %v1470 = vsub.s32 5, %v1469
    %v1471 = vrot.slane %v1398, %v1470
    %v1472 = vlaneseq
    %v1473 = vshrl.u32 %v1472, 7
    %v1474 = vsub.s32 5, %v1473
    %v1475 = vrot.slane %v1397, %v1474
    %v1476 = vmul.f32 %v1454, %v1471
    %v1477 = vmul.f32 %v1455, %v1475
    %v1478 = vadd.f32 %v1451, %v1476
    %v1479 = vadd.f32 %v1452, %v1477
    %s1480 = scalar_lea.vmem [#allocation4], 176
    %v1481 = vld [vmem:[%s1480] sm:$0xff]
    %v1482 = vld [vmem:[%s1480 + $0x8] sm:$0xff]
    %v1483 = vlaneseq
    %v1484 = vshrl.u32 %v1483, 7
    %v1485 = vsub.s32 6, %v1484
    %v1486 = vrot.slane %v1398, %v1485
    %v1487 = vlaneseq
    %v1488 = vshrl.u32 %v1487, 7
    %v1489 = vsub.s32 6, %v1488
    %v1490 = vrot.slane %v1397, %v1489
    %v1491 = vmul.f32 %v1481, %v1486
    %v1492 = vmul.f32 %v1482, %v1490
    %v1493 = vadd.f32 %v1466, %v1491
    %v1494 = vadd.f32 %v1467, %v1492
    %v1495 = vlaneseq
    %v1496 = vshrl.u32 %v1495, 7
    %v1497 = vsub.s32 7, %v1496
    %v1498 = vrot.slane %v1398, %v1497
    %v1499 = vlaneseq
    %v1500 = vshrl.u32 %v1499, 7
    %v1501 = vsub.s32 7, %v1500
    %v1502 = vrot.slane %v1397, %v1501
    %v1503 = vmul.f32 %v1481, %v1498
    %v1504 = vmul.f32 %v1482, %v1502
    %v1505 = vadd.f32 %v1478, %v1503
    %v1506 = vadd.f32 %v1479, %v1504
    %1507 = vrot.lane.b32.xlu0 %v1159, 1
    %v1508 = vpop.permute.xlu0 %1507
    %1509 = vrot.lane.b32.xlu0 %v1160, 1
    %v1510 = vpop.permute.xlu0 %1509
    %vm1511 = vcmp.lt.s32.totalorder %v1166, 1
    %v1512 = vsel %vm1511, %v1508, %v1510
    %v1513 = vsel %vm1511, %v1510, %v1508
    %s1514 = scalar_lea.vmem [#allocation4], 192
    %v1515 = vld [vmem:[%s1514] sm:$0xff]
    %v1516 = vld [vmem:[%s1514 + $0x8] sm:$0xff]
    %v1517 = vlaneseq
    %v1518 = vshrl.u32 %v1517, 7
    %v1519 = vsub.s32 0, %v1518
    %v1520 = vrot.slane %v1513, %v1519
    %v1521 = vlaneseq
    %v1522 = vshrl.u32 %v1521, 7
    %v1523 = vsub.s32 0, %v1522
    %v1524 = vrot.slane %v1512, %v1523
    %v1525 = vmul.f32 %v1515, %v1520
    %v1526 = vmul.f32 %v1516, %v1524
    %v1527 = vadd.f32 %v1493, %v1525
    %v1528 = vadd.f32 %v1494, %v1526
    %v1529 = vlaneseq
    %v1530 = vshrl.u32 %v1529, 7
    %v1531 = vsub.s32 1, %v1530
    %v1532 = vrot.slane %v1513, %v1531
    %v1533 = vlaneseq
    %v1534 = vshrl.u32 %v1533, 7
    %v1535 = vsub.s32 1, %v1534
    %v1536 = vrot.slane %v1512, %v1535
    %v1537 = vmul.f32 %v1515, %v1532
    %v1538 = vmul.f32 %v1516, %v1536
    %v1539 = vadd.f32 %v1505, %v1537
    %v1540 = vadd.f32 %v1506, %v1538
    %s1541 = scalar_lea.vmem [#allocation4], 208
    %v1542 = vld [vmem:[%s1541] sm:$0xff]
    %v1543 = vld [vmem:[%s1541 + $0x8] sm:$0xff]
    %v1544 = vlaneseq
    %v1545 = vshrl.u32 %v1544, 7
    %v1546 = vsub.s32 2, %v1545
    %v1547 = vrot.slane %v1513, %v1546
    %v1548 = vlaneseq
    %v1549 = vshrl.u32 %v1548, 7
    %v1550 = vsub.s32 2, %v1549
    %v1551 = vrot.slane %v1512, %v1550
    %v1552 = vmul.f32 %v1542, %v1547
    %v1553 = vmul.f32 %v1543, %v1551
    %v1554 = vadd.f32 %v1527, %v1552
    %v1555 = vadd.f32 %v1528, %v1553
    %v1556 = vlaneseq
    %v1557 = vshrl.u32 %v1556, 7
    %v1558 = vsub.s32 3, %v1557
    %v1559 = vrot.slane %v1513, %v1558
    %v1560 = vlaneseq
    %v1561 = vshrl.u32 %v1560, 7
    %v1562 = vsub.s32 3, %v1561
    %v1563 = vrot.slane %v1512, %v1562
    %v1564 = vmul.f32 %v1542, %v1559
    %v1565 = vmul.f32 %v1543, %v1563
    %v1566 = vadd.f32 %v1539, %v1564
    %v1567 = vadd.f32 %v1540, %v1565
    %s1568 = scalar_lea.vmem [#allocation4], 224
    %v1569 = vld [vmem:[%s1568] sm:$0xff]
    %v1570 = vld [vmem:[%s1568 + $0x8] sm:$0xff]
    %v1571 = vlaneseq
    %v1572 = vshrl.u32 %v1571, 7
    %v1573 = vsub.s32 4, %v1572
    %v1574 = vrot.slane %v1513, %v1573
    %v1575 = vlaneseq
    %v1576 = vshrl.u32 %v1575, 7
    %v1577 = vsub.s32 4, %v1576
    %v1578 = vrot.slane %v1512, %v1577
    %v1579 = vmul.f32 %v1569, %v1574
    %v1580 = vmul.f32 %v1570, %v1578
    %v1581 = vadd.f32 %v1554, %v1579
    %v1582 = vadd.f32 %v1555, %v1580
    %v1583 = vlaneseq
    %v1584 = vshrl.u32 %v1583, 7
    %v1585 = vsub.s32 5, %v1584
    %v1586 = vrot.slane %v1513, %v1585
    %v1587 = vlaneseq
    %v1588 = vshrl.u32 %v1587, 7
    %v1589 = vsub.s32 5, %v1588
    %v1590 = vrot.slane %v1512, %v1589
    %v1591 = vmul.f32 %v1569, %v1586
    %v1592 = vmul.f32 %v1570, %v1590
    %v1593 = vadd.f32 %v1566, %v1591
    %v1594 = vadd.f32 %v1567, %v1592
    %s1595 = scalar_lea.vmem [#allocation4], 240
    %v1596 = vld [vmem:[%s1595] sm:$0xff]
    %v1597 = vld [vmem:[%s1595 + $0x8] sm:$0xff]
    %v1598 = vlaneseq
    %v1599 = vshrl.u32 %v1598, 7
    %v1600 = vsub.s32 6, %v1599
    %v1601 = vrot.slane %v1513, %v1600
    %v1602 = vlaneseq
    %v1603 = vshrl.u32 %v1602, 7
    %v1604 = vsub.s32 6, %v1603
    %v1605 = vrot.slane %v1512, %v1604
    %v1606 = vmul.f32 %v1596, %v1601
    %v1607 = vmul.f32 %v1597, %v1605
    %v1608 = vadd.f32 %v1581, %v1606
    %v1609 = vadd.f32 %v1582, %v1607
    %v1610 = vlaneseq
    %v1611 = vshrl.u32 %v1610, 7
    %v1612 = vsub.s32 7, %v1611
    %v1613 = vrot.slane %v1513, %v1612
    %v1614 = vlaneseq
    %v1615 = vshrl.u32 %v1614, 7
    %v1616 = vsub.s32 7, %v1615
    %v1617 = vrot.slane %v1512, %v1616
    %v1618 = vmul.f32 %v1596, %v1613
    %v1619 = vmul.f32 %v1597, %v1617
    %v1620 = vadd.f32 %v1593, %v1618
    %v1621 = vadd.f32 %v1594, %v1619
    %s1622 = scalar_lea.vmem [#allocation4], 256
    %v1623 = vld [vmem:[%s1622] sm:$0xff]
    %v1624 = vld [vmem:[%s1622 + $0x8] sm:$0xff]
    %v1625 = vlaneseq
    %v1626 = vshrl.u32 %v1625, 7
    %v1627 = vsub.s32 0, %v1626
    %v1628 = vrot.slane %v1159, %v1627
    %v1629 = vlaneseq
    %v1630 = vshrl.u32 %v1629, 7
    %v1631 = vsub.s32 0, %v1630
    %v1632 = vrot.slane %v1160, %v1631
    %v1633 = vmul.f32 %v1623, %v1628
    %v1634 = vmul.f32 %v1624, %v1632
    %v1635 = vadd.f32 %v1608, %v1633
    %v1636 = vadd.f32 %v1609, %v1634
    %v1637 = vlaneseq
    %v1638 = vshrl.u32 %v1637, 7
    %v1639 = vsub.s32 1, %v1638
    %v1640 = vrot.slane %v1159, %v1639
    %v1641 = vlaneseq
    %v1642 = vshrl.u32 %v1641, 7
    %v1643 = vsub.s32 1, %v1642
    %v1644 = vrot.slane %v1160, %v1643
    %v1645 = vmul.f32 %v1623, %v1640
    %v1646 = vmul.f32 %v1624, %v1644
    %v1647 = vadd.f32 %v1620, %v1645
    %v1648 = vadd.f32 %v1621, %v1646
    %s1649 = scalar_lea.vmem [#allocation4], 272
    %v1650 = vld [vmem:[%s1649] sm:$0xff]
    %v1651 = vld [vmem:[%s1649 + $0x8] sm:$0xff]
    %v1652 = vlaneseq
    %v1653 = vshrl.u32 %v1652, 7
    %v1654 = vsub.s32 2, %v1653
    %v1655 = vrot.slane %v1159, %v1654
    %v1656 = vlaneseq
    %v1657 = vshrl.u32 %v1656, 7
    %v1658 = vsub.s32 2, %v1657
    %v1659 = vrot.slane %v1160, %v1658
    %v1660 = vmul.f32 %v1650, %v1655
    %v1661 = vmul.f32 %v1651, %v1659
    %v1662 = vadd.f32 %v1635, %v1660
    %v1663 = vadd.f32 %v1636, %v1661
    %v1664 = vlaneseq
    %v1665 = vshrl.u32 %v1664, 7
    %v1666 = vsub.s32 3, %v1665
    %v1667 = vrot.slane %v1159, %v1666
    %v1668 = vlaneseq
    %v1669 = vshrl.u32 %v1668, 7
    %v1670 = vsub.s32 3, %v1669
    %v1671 = vrot.slane %v1160, %v1670
    %v1672 = vmul.f32 %v1650, %v1667
    %v1673 = vmul.f32 %v1651, %v1671
    %v1674 = vadd.f32 %v1647, %v1672
    %v1675 = vadd.f32 %v1648, %v1673
    %s1676 = scalar_lea.vmem [#allocation4], 288
    %v1677 = vld [vmem:[%s1676] sm:$0xff]
    %v1678 = vld [vmem:[%s1676 + $0x8] sm:$0xff]
    %v1679 = vlaneseq
    %v1680 = vshrl.u32 %v1679, 7
    %v1681 = vsub.s32 4, %v1680
    %v1682 = vrot.slane %v1159, %v1681
    %v1683 = vlaneseq
    %v1684 = vshrl.u32 %v1683, 7
    %v1685 = vsub.s32 4, %v1684
    %v1686 = vrot.slane %v1160, %v1685
    %v1687 = vmul.f32 %v1677, %v1682
    %v1688 = vmul.f32 %v1678, %v1686
    %v1689 = vadd.f32 %v1662, %v1687
    %v1690 = vadd.f32 %v1663, %v1688
    %v1691 = vlaneseq
    %v1692 = vshrl.u32 %v1691, 7
    %v1693 = vsub.s32 5, %v1692
    %v1694 = vrot.slane %v1159, %v1693
    %v1695 = vlaneseq
    %v1696 = vshrl.u32 %v1695, 7
    %v1697 = vsub.s32 5, %v1696
    %v1698 = vrot.slane %v1160, %v1697
    %v1699 = vmul.f32 %v1677, %v1694
    %v1700 = vmul.f32 %v1678, %v1698
    %v1701 = vadd.f32 %v1674, %v1699
    %v1702 = vadd.f32 %v1675, %v1700
    %s1703 = scalar_lea.vmem [#allocation4], 304
    %v1704 = vld [vmem:[%s1703] sm:$0xff]
    %v1705 = vld [vmem:[%s1703 + $0x8] sm:$0xff]
    %v1706 = vlaneseq
    %v1707 = vshrl.u32 %v1706, 7
    %v1708 = vsub.s32 6, %v1707
    %v1709 = vrot.slane %v1159, %v1708
    %v1710 = vlaneseq
    %v1711 = vshrl.u32 %v1710, 7
    %v1712 = vsub.s32 6, %v1711
    %v1713 = vrot.slane %v1160, %v1712
    %v1714 = vmul.f32 %v1704, %v1709
    %v1715 = vmul.f32 %v1705, %v1713
    %v1716 = vadd.f32 %v1689, %v1714
    %v1717 = vadd.f32 %v1690, %v1715
    %v1718 = vlaneseq
    %v1719 = vshrl.u32 %v1718, 7
    %v1720 = vsub.s32 7, %v1719
    %v1721 = vrot.slane %v1159, %v1720
    %v1722 = vlaneseq
    %v1723 = vshrl.u32 %v1722, 7
    %v1724 = vsub.s32 7, %v1723
    %v1725 = vrot.slane %v1160, %v1724
    %v1726 = vmul.f32 %v1704, %v1721
    %v1727 = vmul.f32 %v1705, %v1725
    %v1728 = vadd.f32 %v1701, %v1726
    %v1729 = vadd.f32 %v1702, %v1727
    %1730 = vrot.lane.b32.xlu0 %v1159, 127
    %v1731 = vpop.permute.xlu0 %1730
    %1732 = vrot.lane.b32.xlu0 %v1160, 127
    %v1733 = vpop.permute.xlu0 %1732
    %vm1734 = vcmp.lt.s32.totalorder %v1166, 127
    %v1735 = vsel %vm1734, %v1731, %v1733
    %v1736 = vsel %vm1734, %v1733, %v1731
    %s1737 = scalar_lea.vmem [#allocation4], 320
    %v1738 = vld [vmem:[%s1737] sm:$0xff]
    %v1739 = vld [vmem:[%s1737 + $0x8] sm:$0xff]
    %v1740 = vlaneseq
    %v1741 = vshrl.u32 %v1740, 7
    %v1742 = vsub.s32 0, %v1741
    %v1743 = vrot.slane %v1735, %v1742
    %v1744 = vlaneseq
    %v1745 = vshrl.u32 %v1744, 7
    %v1746 = vsub.s32 0, %v1745
    %v1747 = vrot.slane %v1736, %v1746
    %v1748 = vmul.f32 %v1738, %v1743
    %v1749 = vmul.f32 %v1739, %v1747
    %v1750 = vadd.f32 %v1716, %v1748
    %v1751 = vadd.f32 %v1717, %v1749
    %v1752 = vlaneseq
    %v1753 = vshrl.u32 %v1752, 7
    %v1754 = vsub.s32 1, %v1753
    %v1755 = vrot.slane %v1735, %v1754
    %v1756 = vlaneseq
    %v1757 = vshrl.u32 %v1756, 7
    %v1758 = vsub.s32 1, %v1757
    %v1759 = vrot.slane %v1736, %v1758
    %v1760 = vmul.f32 %v1738, %v1755
    %v1761 = vmul.f32 %v1739, %v1759
    %v1762 = vadd.f32 %v1728, %v1760
    %v1763 = vadd.f32 %v1729, %v1761
    %s1764 = scalar_lea.vmem [#allocation4], 336
    %v1765 = vld [vmem:[%s1764] sm:$0xff]
    %v1766 = vld [vmem:[%s1764 + $0x8] sm:$0xff]
    %v1767 = vlaneseq
    %v1768 = vshrl.u32 %v1767, 7
    %v1769 = vsub.s32 2, %v1768
    %v1770 = vrot.slane %v1735, %v1769
    %v1771 = vlaneseq
    %v1772 = vshrl.u32 %v1771, 7
    %v1773 = vsub.s32 2, %v1772
    %v1774 = vrot.slane %v1736, %v1773
    %v1775 = vmul.f32 %v1765, %v1770
    %v1776 = vmul.f32 %v1766, %v1774
    %v1777 = vadd.f32 %v1750, %v1775
    %v1778 = vadd.f32 %v1751, %v1776
    %v1779 = vlaneseq
    %v1780 = vshrl.u32 %v1779, 7
    %v1781 = vsub.s32 3, %v1780
    %v1782 = vrot.slane %v1735, %v1781
    %v1783 = vlaneseq
    %v1784 = vshrl.u32 %v1783, 7
    %v1785 = vsub.s32 3, %v1784
    %v1786 = vrot.slane %v1736, %v1785
    %v1787 = vmul.f32 %v1765, %v1782
    %v1788 = vmul.f32 %v1766, %v1786
    %v1789 = vadd.f32 %v1762, %v1787
    %v1790 = vadd.f32 %v1763, %v1788
    %s1791 = scalar_lea.vmem [#allocation4], 352
    %v1792 = vld [vmem:[%s1791] sm:$0xff]
    %v1793 = vld [vmem:[%s1791 + $0x8] sm:$0xff]
    %v1794 = vlaneseq
    %v1795 = vshrl.u32 %v1794, 7
    %v1796 = vsub.s32 4, %v1795
    %v1797 = vrot.slane %v1735, %v1796
    %v1798 = vlaneseq
    %v1799 = vshrl.u32 %v1798, 7
    %v1800 = vsub.s32 4, %v1799
    %v1801 = vrot.slane %v1736, %v1800
    %v1802 = vmul.f32 %v1792, %v1797
    %v1803 = vmul.f32 %v1793, %v1801
    %v1804 = vadd.f32 %v1777, %v1802
    %v1805 = vadd.f32 %v1778, %v1803
    %v1806 = vlaneseq
    %v1807 = vshrl.u32 %v1806, 7
    %v1808 = vsub.s32 5, %v1807
    %v1809 = vrot.slane %v1735, %v1808
    %v1810 = vlaneseq
    %v1811 = vshrl.u32 %v1810, 7
    %v1812 = vsub.s32 5, %v1811
    %v1813 = vrot.slane %v1736, %v1812
    %v1814 = vmul.f32 %v1792, %v1809
    %v1815 = vmul.f32 %v1793, %v1813
    %v1816 = vadd.f32 %v1789, %v1814
    %v1817 = vadd.f32 %v1790, %v1815
    %s1818 = scalar_lea.vmem [#allocation4], 368
    %v1819 = vld [vmem:[%s1818] sm:$0xff]
    %v1820 = vld [vmem:[%s1818 + $0x8] sm:$0xff]
    %v1821 = vlaneseq
    %v1822 = vshrl.u32 %v1821, 7
    %v1823 = vsub.s32 6, %v1822
    %v1824 = vrot.slane %v1735, %v1823
    %v1825 = vlaneseq
    %v1826 = vshrl.u32 %v1825, 7
    %v1827 = vsub.s32 6, %v1826
    %v1828 = vrot.slane %v1736, %v1827
    %v1829 = vmul.f32 %v1819, %v1824
    %v1830 = vmul.f32 %v1820, %v1828
    %v1831 = vadd.f32 %v1804, %v1829
    %v1832 = vadd.f32 %v1805, %v1830
    %v1833 = vlaneseq
    %v1834 = vshrl.u32 %v1833, 7
    %v1835 = vsub.s32 7, %v1834
    %v1836 = vrot.slane %v1735, %v1835
    %v1837 = vlaneseq
    %v1838 = vshrl.u32 %v1837, 7
    %v1839 = vsub.s32 7, %v1838
    %v1840 = vrot.slane %v1736, %v1839
    %v1841 = vmul.f32 %v1819, %v1836
    %v1842 = vmul.f32 %v1820, %v1840
    %v1843 = vadd.f32 %v1816, %v1841
    %v1844 = vadd.f32 %v1817, %v1842
    %1845 = vrot.lane.b32.xlu0 %v1159, 113
    %v1846 = vpop.permute.xlu0 %1845
    %1847 = vrot.lane.b32.xlu0 %v1160, 113
    %v1848 = vpop.permute.xlu0 %1847
    %vm1849 = vcmp.lt.s32.totalorder %v1166, 113
    %v1850 = vsel %vm1849, %v1846, %v1848
    %v1851 = vsel %vm1849, %v1848, %v1846
    %s1852 = scalar_lea.vmem [#allocation4], 384
    %v1853 = vld [vmem:[%s1852] sm:$0xff]
    %v1854 = vld [vmem:[%s1852 + $0x8] sm:$0xff]
    %v1855 = vlaneseq
    %v1856 = vshrl.u32 %v1855, 7
    %v1857 = vsub.s32 0, %v1856
    %v1858 = vrot.slane %v1850, %v1857
    %v1859 = vlaneseq
    %v1860 = vshrl.u32 %v1859, 7
    %v1861 = vsub.s32 0, %v1860
    %v1862 = vrot.slane %v1851, %v1861
    %v1863 = vmul.f32 %v1853, %v1858
    %v1864 = vmul.f32 %v1854, %v1862
    %v1865 = vadd.f32 %v1831, %v1863
    %v1866 = vadd.f32 %v1832, %v1864
    %v1867 = vlaneseq
    %v1868 = vshrl.u32 %v1867, 7
    %v1869 = vsub.s32 1, %v1868
    %v1870 = vrot.slane %v1850, %v1869
    %v1871 = vlaneseq
    %v1872 = vshrl.u32 %v1871, 7
    %v1873 = vsub.s32 1, %v1872
    %v1874 = vrot.slane %v1851, %v1873
    %v1875 = vmul.f32 %v1853, %v1870
    %v1876 = vmul.f32 %v1854, %v1874
    %v1877 = vadd.f32 %v1843, %v1875
    %v1878 = vadd.f32 %v1844, %v1876
    %s1879 = scalar_lea.vmem [#allocation4], 400
    %v1880 = vld [vmem:[%s1879] sm:$0xff]
    %v1881 = vld [vmem:[%s1879 + $0x8] sm:$0xff]
    %v1882 = vlaneseq
    %v1883 = vshrl.u32 %v1882, 7
    %v1884 = vsub.s32 2, %v1883
    %v1885 = vrot.slane %v1850, %v1884
    %v1886 = vlaneseq
    %v1887 = vshrl.u32 %v1886, 7
    %v1888 = vsub.s32 2, %v1887
    %v1889 = vrot.slane %v1851, %v1888
    %v1890 = vmul.f32 %v1880, %v1885
    %v1891 = vmul.f32 %v1881, %v1889
    %v1892 = vadd.f32 %v1865, %v1890
    %v1893 = vadd.f32 %v1866, %v1891
    %v1894 = vlaneseq
    %v1895 = vshrl.u32 %v1894, 7
    %v1896 = vsub.s32 3, %v1895
    %v1897 = vrot.slane %v1850, %v1896
    %v1898 = vlaneseq
    %v1899 = vshrl.u32 %v1898, 7
    %v1900 = vsub.s32 3, %v1899
    %v1901 = vrot.slane %v1851, %v1900
    %v1902 = vmul.f32 %v1880, %v1897
    %v1903 = vmul.f32 %v1881, %v1901
    %v1904 = vadd.f32 %v1877, %v1902
    %v1905 = vadd.f32 %v1878, %v1903
    %s1906 = scalar_lea.vmem [#allocation4], 416
    %v1907 = vld [vmem:[%s1906] sm:$0xff]
    %v1908 = vld [vmem:[%s1906 + $0x8] sm:$0xff]
    %v1909 = vlaneseq
    %v1910 = vshrl.u32 %v1909, 7
    %v1911 = vsub.s32 4, %v1910
    %v1912 = vrot.slane %v1850, %v1911
    %v1913 = vlaneseq
    %v1914 = vshrl.u32 %v1913, 7
    %v1915 = vsub.s32 4, %v1914
    %v1916 = vrot.slane %v1851, %v1915
    %v1917 = vmul.f32 %v1907, %v1912
    %v1918 = vmul.f32 %v1908, %v1916
    %v1919 = vadd.f32 %v1892, %v1917
    %v1920 = vadd.f32 %v1893, %v1918
    %v1921 = vlaneseq
    %v1922 = vshrl.u32 %v1921, 7
    %v1923 = vsub.s32 5, %v1922
    %v1924 = vrot.slane %v1850, %v1923
    %v1925 = vlaneseq
    %v1926 = vshrl.u32 %v1925, 7
    %v1927 = vsub.s32 5, %v1926
    %v1928 = vrot.slane %v1851, %v1927
    %v1929 = vmul.f32 %v1907, %v1924
    %v1930 = vmul.f32 %v1908, %v1928
    %v1931 = vadd.f32 %v1904, %v1929
    %v1932 = vadd.f32 %v1905, %v1930
    %s1933 = scalar_lea.vmem [#allocation4], 432
    %v1934 = vld [vmem:[%s1933] sm:$0xff]
    %v1935 = vld [vmem:[%s1933 + $0x8] sm:$0xff]
    %v1936 = vlaneseq
    %v1937 = vshrl.u32 %v1936, 7
    %v1938 = vsub.s32 6, %v1937
    %v1939 = vrot.slane %v1850, %v1938
    %v1940 = vlaneseq
    %v1941 = vshrl.u32 %v1940, 7
    %v1942 = vsub.s32 6, %v1941
    %v1943 = vrot.slane %v1851, %v1942
    %v1944 = vmul.f32 %v1934, %v1939
    %v1945 = vmul.f32 %v1935, %v1943
    %v1946 = vadd.f32 %v1919, %v1944
    %v1947 = vadd.f32 %v1920, %v1945
    %v1948 = vlaneseq
    %v1949 = vshrl.u32 %v1948, 7
    %v1950 = vsub.s32 7, %v1949
    %v1951 = vrot.slane %v1850, %v1950
    %v1952 = vlaneseq
    %v1953 = vshrl.u32 %v1952, 7
    %v1954 = vsub.s32 7, %v1953
    %v1955 = vrot.slane %v1851, %v1954
    %v1956 = vmul.f32 %v1934, %v1951
    %v1957 = vmul.f32 %v1935, %v1955
    %v1958 = vadd.f32 %v1931, %v1956
    %v1959 = vadd.f32 %v1932, %v1957
    %1960 = vrot.lane.b32.xlu0 %v1159, 112
    %v1961 = vpop.permute.xlu0 %1960
    %1962 = vrot.lane.b32.xlu0 %v1160, 112
    %v1963 = vpop.permute.xlu0 %1962
    %vm1964 = vcmp.lt.s32.totalorder %v1166, 112
    %v1965 = vsel %vm1964, %v1961, %v1963
    %v1966 = vsel %vm1964, %v1963, %v1961
    %s1967 = scalar_lea.vmem [#allocation4], 448
    %v1968 = vld [vmem:[%s1967] sm:$0xff]
    %v1969 = vld [vmem:[%s1967 + $0x8] sm:$0xff]
    %v1970 = vlaneseq
    %v1971 = vshrl.u32 %v1970, 7
    %v1972 = vsub.s32 0, %v1971
    %v1973 = vrot.slane %v1965, %v1972
    %v1974 = vlaneseq
    %v1975 = vshrl.u32 %v1974, 7
    %v1976 = vsub.s32 0, %v1975
    %v1977 = vrot.slane %v1966, %v1976
    %v1978 = vmul.f32 %v1968, %v1973
    %v1979 = vmul.f32 %v1969, %v1977
    %v1980 = vadd.f32 %v1946, %v1978
    %v1981 = vadd.f32 %v1947, %v1979
    %v1982 = vlaneseq
    %v1983 = vshrl.u32 %v1982, 7
    %v1984 = vsub.s32 1, %v1983
    %v1985 = vrot.slane %v1965, %v1984
    %v1986 = vlaneseq
    %v1987 = vshrl.u32 %v1986, 7
    %v1988 = vsub.s32 1, %v1987
    %v1989 = vrot.slane %v1966, %v1988
    %v1990 = vmul.f32 %v1968, %v1985
    %v1991 = vmul.f32 %v1969, %v1989
    %v1992 = vadd.f32 %v1958, %v1990
    %v1993 = vadd.f32 %v1959, %v1991
    %s1994 = scalar_lea.vmem [#allocation4], 464
    %v1995 = vld [vmem:[%s1994] sm:$0xff]
    %v1996 = vld [vmem:[%s1994 + $0x8] sm:$0xff]
    %v1997 = vlaneseq
    %v1998 = vshrl.u32 %v1997, 7
    %v1999 = vsub.s32 2, %v1998
    %v2000 = vrot.slane %v1965, %v1999
    %v2001 = vlaneseq
    %v2002 = vshrl.u32 %v2001, 7
    %v2003 = vsub.s32 2, %v2002
    %v2004 = vrot.slane %v1966, %v2003
    %v2005 = vmul.f32 %v1995, %v2000
    %v2006 = vmul.f32 %v1996, %v2004
    %v2007 = vadd.f32 %v1980, %v2005
    %v2008 = vadd.f32 %v1981, %v2006
    %v2009 = vlaneseq
    %v2010 = vshrl.u32 %v2009, 7
    %v2011 = vsub.s32 3, %v2010
    %v2012 = vrot.slane %v1965, %v2011
    %v2013 = vlaneseq
    %v2014 = vshrl.u32 %v2013, 7
    %v2015 = vsub.s32 3, %v2014
    %v2016 = vrot.slane %v1966, %v2015
    %v2017 = vmul.f32 %v1995, %v2012
    %v2018 = vmul.f32 %v1996, %v2016
    %v2019 = vadd.f32 %v1992, %v2017
    %v2020 = vadd.f32 %v1993, %v2018
    %s2021 = scalar_lea.vmem [#allocation4], 480
    %v2022 = vld [vmem:[%s2021] sm:$0xff]
    %v2023 = vld [vmem:[%s2021 + $0x8] sm:$0xff]
    %v2024 = vlaneseq
    %v2025 = vshrl.u32 %v2024, 7
    %v2026 = vsub.s32 4, %v2025
    %v2027 = vrot.slane %v1965, %v2026
    %v2028 = vlaneseq
    %v2029 = vshrl.u32 %v2028, 7
    %v2030 = vsub.s32 4, %v2029
    %v2031 = vrot.slane %v1966, %v2030
    %v2032 = vmul.f32 %v2022, %v2027
    %v2033 = vmul.f32 %v2023, %v2031
    %v2034 = vadd.f32 %v2007, %v2032
    %v2035 = vadd.f32 %v2008, %v2033
    %v2036 = vlaneseq
    %v2037 = vshrl.u32 %v2036, 7
    %v2038 = vsub.s32 5, %v2037
    %v2039 = vrot.slane %v1965, %v2038
    %v2040 = vlaneseq
    %v2041 = vshrl.u32 %v2040, 7
    %v2042 = vsub.s32 5, %v2041
    %v2043 = vrot.slane %v1966, %v2042
    %v2044 = vmul.f32 %v2022, %v2039
    %v2045 = vmul.f32 %v2023, %v2043
    %v2046 = vadd.f32 %v2019, %v2044
    %v2047 = vadd.f32 %v2020, %v2045
    %s2048 = scalar_lea.vmem [#allocation4], 496
    %v2049 = vld [vmem:[%s2048] sm:$0xff]
    %v2050 = vld [vmem:[%s2048 + $0x8] sm:$0xff]
    %v2051 = vlaneseq
    %v2052 = vshrl.u32 %v2051, 7
    %v2053 = vsub.s32 6, %v2052
    %v2054 = vrot.slane %v1965, %v2053
    %v2055 = vlaneseq
    %v2056 = vshrl.u32 %v2055, 7
    %v2057 = vsub.s32 6, %v2056
    %v2058 = vrot.slane %v1966, %v2057
    %v2059 = vmul.f32 %v2049, %v2054
    %v2060 = vmul.f32 %v2050, %v2058
    %v2061 = vadd.f32 %v2034, %v2059
    %v2062 = vadd.f32 %v2035, %v2060
    %v2063 = vlaneseq
    %v2064 = vshrl.u32 %v2063, 7
    %v2065 = vsub.s32 7, %v2064
    %v2066 = vrot.slane %v1965, %v2065
    %v2067 = vlaneseq
    %v2068 = vshrl.u32 %v2067, 7
    %v2069 = vsub.s32 7, %v2068
    %v2070 = vrot.slane %v1966, %v2069
    %v2071 = vmul.f32 %v2049, %v2066
    %v2072 = vmul.f32 %v2050, %v2070
    %v2073 = vadd.f32 %v2046, %v2071
    %v2074 = vadd.f32 %v2047, %v2072
    %2075 = vrot.lane.b32.xlu0 %v1159, 111
    %v2076 = vpop.permute.xlu0 %2075
    %2077 = vrot.lane.b32.xlu0 %v1160, 111
    %v2078 = vpop.permute.xlu0 %2077
    %vm2079 = vcmp.lt.s32.totalorder %v1166, 111
    %v2080 = vsel %vm2079, %v2076, %v2078
    %v2081 = vsel %vm2079, %v2078, %v2076
    %s2082 = scalar_lea.vmem [#allocation4], 512
    %v2083 = vld [vmem:[%s2082] sm:$0xff]
    %v2084 = vld [vmem:[%s2082 + $0x8] sm:$0xff]
    %v2085 = vlaneseq
    %v2086 = vshrl.u32 %v2085, 7
    %v2087 = vsub.s32 0, %v2086
    %v2088 = vrot.slane %v2080, %v2087
    %v2089 = vlaneseq
    %v2090 = vshrl.u32 %v2089, 7
    %v2091 = vsub.s32 0, %v2090
    %v2092 = vrot.slane %v2081, %v2091
    %v2093 = vmul.f32 %v2083, %v2088
    %v2094 = vmul.f32 %v2084, %v2092
    %v2095 = vadd.f32 %v2061, %v2093
    %v2096 = vadd.f32 %v2062, %v2094
    %v2097 = vlaneseq
    %v2098 = vshrl.u32 %v2097, 7
    %v2099 = vsub.s32 1, %v2098
    %v2100 = vrot.slane %v2080, %v2099
    %v2101 = vlaneseq
    %v2102 = vshrl.u32 %v2101, 7
    %v2103 = vsub.s32 1, %v2102
    %v2104 = vrot.slane %v2081, %v2103
    %v2105 = vmul.f32 %v2083, %v2100
    %v2106 = vmul.f32 %v2084, %v2104
    %v2107 = vadd.f32 %v2073, %v2105
    %v2108 = vadd.f32 %v2074, %v2106
    %s2109 = scalar_lea.vmem [#allocation4], 528
    %v2110 = vld [vmem:[%s2109] sm:$0xff]
    %v2111 = vld [vmem:[%s2109 + $0x8] sm:$0xff]
    %v2112 = vlaneseq
    %v2113 = vshrl.u32 %v2112, 7
    %v2114 = vsub.s32 2, %v2113
    %v2115 = vrot.slane %v2080, %v2114
    %v2116 = vlaneseq
    %v2117 = vshrl.u32 %v2116, 7
    %v2118 = vsub.s32 2, %v2117
    %v2119 = vrot.slane %v2081, %v2118
    %v2120 = vmul.f32 %v2110, %v2115
    %v2121 = vmul.f32 %v2111, %v2119
    %v2122 = vadd.f32 %v2095, %v2120
    %v2123 = vadd.f32 %v2096, %v2121
    %v2124 = vlaneseq
    %v2125 = vshrl.u32 %v2124, 7
    %v2126 = vsub.s32 3, %v2125
    %v2127 = vrot.slane %v2080, %v2126
    %v2128 = vlaneseq
    %v2129 = vshrl.u32 %v2128, 7
    %v2130 = vsub.s32 3, %v2129
    %v2131 = vrot.slane %v2081, %v2130
    %v2132 = vmul.f32 %v2110, %v2127
    %v2133 = vmul.f32 %v2111, %v2131
    %v2134 = vadd.f32 %v2107, %v2132
    %v2135 = vadd.f32 %v2108, %v2133
    %s2136 = scalar_lea.vmem [#allocation4], 544
    %v2137 = vld [vmem:[%s2136] sm:$0xff]
    %v2138 = vld [vmem:[%s2136 + $0x8] sm:$0xff]
    %v2139 = vlaneseq
    %v2140 = vshrl.u32 %v2139, 7
    %v2141 = vsub.s32 4, %v2140
    %v2142 = vrot.slane %v2080, %v2141
    %v2143 = vlaneseq
    %v2144 = vshrl.u32 %v2143, 7
    %v2145 = vsub.s32 4, %v2144
    %v2146 = vrot.slane %v2081, %v2145
    %v2147 = vmul.f32 %v2137, %v2142
    %v2148 = vmul.f32 %v2138, %v2146
    %v2149 = vadd.f32 %v2122, %v2147
    %v2150 = vadd.f32 %v2123, %v2148
    %v2151 = vlaneseq
    %v2152 = vshrl.u32 %v2151, 7
    %v2153 = vsub.s32 5, %v2152
    %v2154 = vrot.slane %v2080, %v2153
    %v2155 = vlaneseq
    %v2156 = vshrl.u32 %v2155, 7
    %v2157 = vsub.s32 5, %v2156
    %v2158 = vrot.slane %v2081, %v2157
    %v2159 = vmul.f32 %v2137, %v2154
    %v2160 = vmul.f32 %v2138, %v2158
    %v2161 = vadd.f32 %v2134, %v2159
    %v2162 = vadd.f32 %v2135, %v2160
    %s2163 = scalar_lea.vmem [#allocation4], 560
    %v2164 = vld [vmem:[%s2163] sm:$0xff]
    %v2165 = vld [vmem:[%s2163 + $0x8] sm:$0xff]
    %v2166 = vlaneseq
    %v2167 = vshrl.u32 %v2166, 7
    %v2168 = vsub.s32 6, %v2167
    %v2169 = vrot.slane %v2080, %v2168
    %v2170 = vlaneseq
    %v2171 = vshrl.u32 %v2170, 7
    %v2172 = vsub.s32 6, %v2171
    %v2173 = vrot.slane %v2081, %v2172
    %v2174 = vmul.f32 %v2164, %v2169
    %v2175 = vmul.f32 %v2165, %v2173
    %v2176 = vadd.f32 %v2149, %v2174
    %v2177 = vadd.f32 %v2150, %v2175
    %v2178 = vlaneseq
    %v2179 = vshrl.u32 %v2178, 7
    %v2180 = vsub.s32 7, %v2179
    %v2181 = vrot.slane %v2080, %v2180
    %v2182 = vlaneseq
    %v2183 = vshrl.u32 %v2182, 7
    %v2184 = vsub.s32 7, %v2183
    %v2185 = vrot.slane %v2081, %v2184
    %v2186 = vmul.f32 %v2164, %v2181
    %v2187 = vmul.f32 %v2165, %v2185
    %v2188 = vadd.f32 %v2161, %v2186
    %v2189 = vadd.f32 %v2162, %v2187
    %v2190 = vadd.f32 %v2176, %v2177
    %2191 = vadd.xlane.f32.xlu0 %v2190
    %v2192 = vpop.xlane.xlu0 %2191
    %v2193 = vadd.f32 %v2188, %v2189
    %2194 = vadd.xlane.f32.xlu0 %v2193
    %v2195 = vpop.xlane.xlu0 %2194
    %v2196 = vadd.f32 %v2192, %v2195
    %v2197 = vmul.f32 %v2196, 0.001953125
    %v2198 = vsub.f32 %v2176, %v2197
    %v2199 = vsub.f32 %v2177, %v2197
    %v2200 = vmul.f32 %v2198, %v2198
    %v2201 = vmul.f32 %v2199, %v2199
    %v2202 = vadd.f32 %v2200, %v2201
    %2203 = vadd.xlane.f32.xlu0 %v2202
    %v2204 = vpop.xlane.xlu0 %2203
    %v2205 = vsub.f32 %v2188, %v2197
    %v2206 = vsub.f32 %v2189, %v2197
    %v2207 = vmul.f32 %v2205, %v2205
    %v2208 = vmul.f32 %v2206, %v2206
    %v2209 = vadd.f32 %v2207, %v2208
    %2210 = vadd.xlane.f32.xlu0 %v2209
    %v2211 = vpop.xlane.xlu0 %2210
    %v2212 = vadd.f32 %v2204, %v2211
    %v2213 = vmul.f32 %v2212, 0.001953125
    %v2214 = vld [vmem:[%s3] sm:$0xff]
    %v2215 = vadd.f32 %v2213, 1e-05
    %v2216 = vrsqrt.pop %v2215
    %v2217 = vmul.f32 %v2214, %v2216
    %v2218 = vld [vmem:[%s4] sm:$0xff]
    %v2219 = vmul.f32 %v2197, %v2217
    %v2220 = vsub.f32 %v2218, %v2219
    %2222 = vset.pattern.permute.xlu0 0
    %2223 = vperm.xlu0 %2222, %v2217
    %v2224 = vpop.permute.xlu0 %2223
    %v2226 = vmul.f32 %v2176, %v2224
    %v2227 = vmul.f32 %v2177, %v2224
    %2229 = vset.pattern.permute.xlu0 0
    %2230 = vperm.xlu0 %2229, %v2220
    %v2231 = vpop.permute.xlu0 %2230
    %v2233 = vadd.f32 %v2226, %v2231
    %v2234 = vadd.f32 %v2227, %v2231
    %v2235 = vmax.f32 %v2233, 0.0
    %v2236 = vmax.f32 %v2234, 0.0
    %2237 = vst [vmem:[%s5] sm:$0xff] %v2235
    %2238 = vst [vmem:[%s5 + $0x8] sm:$0xff] %v2236
    %v2239 = vmul.f32 %v2188, %v2224
    %v2240 = vmul.f32 %v2189, %v2224
    %v2241 = vadd.f32 %v2239, %v2231
    %v2242 = vadd.f32 %v2240, %v2231
    %v2243 = vmax.f32 %v2241, 0.0
    %v2244 = vmax.f32 %v2242, 0.0
    %s2245 = scalar_lea.vmem %s5, 16
    %2246 = vst [vmem:[%s2245] sm:$0xff] %v2243
    %2247 = vst [vmem:[%s2245 + $0x8] sm:$0xff] %v2244
    // Predicated region
    $region30: #{dconv_3x3.1} parent=1 // pred_check
      _
    $region31: #{dconv_3x3.1} parent=1 // pred_check_branch
      %2249 = sbr.rel (0) target = $region33
    $region32: #{dconv_3x3.1} parent=1 // pred_region
      _
    $region33: #{dconv_3x3.1} parent=1 // pred_fallthru
      _
    // Predicated region
    $region34: #{dconv_3x3.1} parent=1 // pred_check
      _
    $region35: #{dconv_3x3.1} parent=1 // pred_check_branch
      %2251 = sbr.rel (0) target = $region37
    $region36: #{dconv_3x3.1} parent=1 // pred_region
      _
    $region37: #{dconv_3x3.1} parent=1 // pred_fallthru
      _
    %2252 = vsyncpa [#allocation3], 1
    %2253 = vsyncpa [#allocation5], 1

</llo_original>
